<compile_context>
chip_gen: v5e
topology: v5e:2x2
jax: 0.10.0
libtpu: 0.0.40
codegen_flags: <defaults>
</compile_context>

<pallas_src>
import functools

import jax
import jax.numpy as jnp
import numpy as np
from jax.experimental import pallas as pl
from jax.experimental.pallas import tpu as pltpu


def autopad(k, p=None):
    if p is None:
        p = k // 2 if isinstance(k, int) else [x // 2 for x in k]
    return p


def _round_up(x, m):
    return ((x + m - 1) // m) * m


# ---------------------------------------------------------------------------
# Pallas kernel: fused direct conv (k*k shifted-window matmuls) + bias + ReLU.
# ---------------------------------------------------------------------------
def _fused_conv_kernel(*refs, k, s, tr, w_out, cin, halo, act):
    """One grid step: all k*k taps, full Cin contraction, bias, ReLU, store."""
    if halo > 0:
        x_ref, xh_ref, w_ref, b_ref, o_ref = refs
    else:
        x_ref, w_ref, b_ref, o_ref = refs

    x = x_ref[0]                                   # (B, Wp, Cin) rows of this tile
    if halo > 0:
        # Halo rows come from the *next* row block of the same padded input.
        x = jnp.concatenate([x, xh_ref[0, :halo]], axis=0)   # (B + halo, Wp, Cin)

    m = tr * w_out
    tn = o_ref.shape[-1]
    acc = None
    for kh in range(k):
        for kw in range(k):
            xs = x[kh:kh + (tr - 1) * s + 1:s,
                   kw:kw + (w_out - 1) * s + 1:s, :]          # (tr, w_out, cin)
            xs = xs.reshape(m, cin)                           # sublane-aligned merge
            d = jnp.dot(xs, w_ref[kh, kw],
                        preferred_element_type=jnp.float32)   # MXU, f32 accumulate
            acc = d if acc is None else acc + d
    acc = acc + b_ref[...]                                    # (m, tn) + (1, tn)
    if act:
        acc = jnp.maximum(acc, 0.0)                           # ReLU
    o_ref[...] = acc.reshape(1, m, tn).astype(o_ref.dtype)


def _pick_tn(cout_pad, cin_p, k, csize, budget=8 * 1024 * 1024):
    """Largest Cout tile (multiple of 128, divides Cout_pad) whose weight block fits."""
    for tn in (cout_pad, 1024, 512, 256, 128):
        if tn <= cout_pad and cout_pad % tn == 0 and k * k * cin_p * tn * csize <= budget:
            return tn
    return 128


# ---------------------------------------------------------------------------
# JAX glue: padding / parameter folding (BN folded if enabled) + pallas_call.
# ---------------------------------------------------------------------------
def conv_forward(x, params, *, kernel_size, stride=1, padding=None, groups=1,
                 bn=False, act=True, bn_eps=1e-5,
                 compute_dtype=jnp.bfloat16, out_dtype=None):
    """Forward pass matching the PyTorch `Conv` module. x: [N, Cin, H, W] (NCHW)."""
    if groups != 1:
        # TODO(synk): grouped convolution (groups > 1) not implemented.
        raise NotImplementedError("groups != 1 not supported")

    k = int(kernel_size)
    s = int(stride)
    pad = autopad(k, padding)
    N, Cin, H, W = x.shape
    H_out = (H + 2 * pad - k) // s + 1
    W_out = (W + 2 * pad - k) // s + 1
    out_dtype = x.dtype if out_dtype is None else out_dtype
    csize = jnp.dtype(compute_dtype).itemsize
    osize = jnp.dtype(out_dtype).itemsize

    w = params["weight"].astype(jnp.float32)              # [Cout, Cin, k, k]
    Cout = w.shape[0]
    if bn:
        # BatchNorm (eval semantics) folded into an effective weight/bias.
        gamma, beta = params["bn_gamma"], params["bn_beta"]
        mean, var = params["bn_mean"], params["bn_var"]
        scale = gamma / jnp.sqrt(var + bn_eps)             # [Cout]
        w_eff = w * scale[:, None, None, None]
        b_eff = beta - mean * scale
    else:
        w_eff = w
        b_eff = params.get("bias", jnp.zeros((Cout,), jnp.float32))

    # ---- padded sizes -------------------------------------------------------
    Cin_p = _round_up(Cin, 8)          # mild contraction/lane padding
    Cout_pad = _round_up(Cout, 128)    # lane-dense, unmasked output stores
    W_out_pad = _round_up(W_out, 16)   # sublane-aligned GEMM rows (bf16 pack = 16)

    halo = max(k - s, 0)               # rows borrowed from the next row block
    tr_min = max(1, pl.cdiv(halo, s))  # halo must fit in one neighbouring block
    tn = _pick_tn(Cout_pad, Cin_p, k, csize)
    n_j = Cout_pad // tn

    # Row tile: target ~1024 GEMM rows per grid step, clipped by a VMEM budget
    # that is sized against v7x's 64 MiB VMEM (v5e/v6e have 128 MiB).
    Wp_pad = max(W + 2 * pad, (W_out_pad - 1) * s + k)
    tr = max(tr_min, min(H_out, max(1, 1024 // W_out_pad)))

    def vmem_est(tr_):
        b_rows = tr_ * s
        x_blk = b_rows * Wp_pad * Cin_p * csize
        h_blk = x_blk if halo > 0 else 0
        w_blk = k * k * Cin_p * tn * csize
        o_blk = tr_ * W_out_pad * tn * osize
        acc = tr_ * W_out_pad * tn * 4
        return 2 * (x_blk + h_blk + w_blk + tn * 4 + o_blk) + acc

    VMEM_BUDGET = 20 * 1024 * 1024
    while tr > tr_min and vmem_est(tr) > VMEM_BUDGET:
        tr = max(tr_min, (tr + 1) // 2)

    n_h = pl.cdiv(H_out, tr)
    B = tr * s
    n_halo_blocks = 1 if halo > 0 else 0
    Hp_pad = max(H + 2 * pad, (n_h + n_halo_blocks) * B)   # all blocks in-bounds

    # ---- input: NCHW -> padded NHWC in the compute dtype --------------------
    x_nhwc = jnp.transpose(x, (0, 2, 3, 1)).astype(compute_dtype)
    x_pad = jnp.pad(x_nhwc, ((0, 0),
                             (pad, Hp_pad - H - pad),
                             (pad, Wp_pad - W - pad),
                             (0, Cin_p - Cin)))

    # ---- weights (k, k, Cin_p, Cout_pad) and bias (1, Cout_pad) --------------
    w_mat = jnp.transpose(w_eff, (2, 3, 1, 0))             # (k, k, Cin, Cout)
    w_mat = jnp.pad(w_mat, ((0, 0), (0, 0),
                            (0, Cin_p - Cin), (0, Cout_pad - Cout)))
    w_mat = w_mat.astype(compute_dtype)
    b_row = jnp.pad(b_eff, (0, Cout_pad - Cout)).reshape(1, Cout_pad).astype(jnp.float32)

    # ---- pallas_call ---------------------------------------------------------
    grid = (n_j, N, n_h)   # j outermost: weight/bias blocks stay resident per pass
    in_specs = [pl.BlockSpec((1, B, Wp_pad, Cin_p), lambda j, n, i: (n, i, 0, 0))]
    operands = [x_pad]
    if halo > 0:
        in_specs.append(
            pl.BlockSpec((1, B, Wp_pad, Cin_p), lambda j, n, i: (n, i + 1, 0, 0)))
        operands.append(x_pad)
    in_specs += [
        pl.BlockSpec((k, k, Cin_p, tn), lambda j, n, i: (0, 0, 0, j)),
        pl.BlockSpec((1, tn), lambda j, n, i: (0, j)),
    ]
    operands += [w_mat, b_row]

    M_rows = H_out * W_out_pad
    flops = 2 * N * H_out * W_out * k * k * Cin * Cout_pad
    bytes_accessed = int(
        n_j * (2 if halo > 0 else 1) * x_pad.size * csize   # input (+halo re-read)
        + w_mat.size * csize + b_row.size * 4               # weights/bias, once
        + N * M_rows * Cout_pad * osize)                    # output write

    out = pl.pallas_call(
        functools.partial(_fused_conv_kernel, k=k, s=s, tr=tr, w_out=W_out_pad,
                          cin=Cin_p, halo=halo, act=act),
        out_shape=jax.ShapeDtypeStruct((N, M_rows, Cout_pad), out_dtype),
        grid_spec=pltpu.PrefetchScalarGridSpec(
            num_scalar_prefetch=0,
            grid=grid,
            in_specs=in_specs,
            out_specs=pl.BlockSpec((1, tr * W_out_pad, tn),
                                   lambda j, n, i: (n, i, j)),
        ),
        compiler_params=pltpu.CompilerParams(
            dimension_semantics=("parallel", "parallel", "parallel"),
            vmem_limit_bytes=int(min(48 * 1024 * 1024,
                                     max(32 * 1024 * 1024, 2 * vmem_est(tr)))),
        ),
        cost_estimate=pl.CostEstimate(flops=flops, transcendentals=0,
                                      bytes_accessed=bytes_accessed),
    )(*operands)

    # Lane/sublane-padded NHWC -> channel slice -> NCHW (module semantics).
    out = out.reshape(N, H_out, W_out_pad, Cout_pad)[:, :, :W_out, :Cout]
    return jnp.transpose(out, (0, 3, 1, 2))


# ---------------------------------------------------------------------------
# Pure-JAX reference + demo / self-check
# ---------------------------------------------------------------------------
def _reference(x, params, *, kernel_size, stride, padding=None, bn=False, act=True):
    pad = autopad(kernel_size, padding)
    w = params["weight"]
    y = jax.lax.conv_general_dilated(
        x, w, window_strides=(stride, stride),
        padding=[(pad, pad), (pad, pad)],
        dimension_numbers=("NCHW", "OIHW", "NCHW"))
    if bn:
        scale = params["bn_gamma"] / jnp.sqrt(params["bn_var"] + 1e-5)
        shift = params["bn_beta"] - params["bn_mean"] * scale
        y = y * scale[None, :, None, None] + shift[None, :, None, None]
    else:
        y = y + params["bias"][None, :, None, None]
    if act:
        y = jnp.maximum(y, 0.0)
    return y


if __name__ == "__main__":
    key = jax.random.PRNGKey(0)
    kx, kw_, kb, kg, kbt, km, kv, kw1, kb1 = jax.random.split(key, 9)

    # Small shapes consistent with the module: batch=2, Cin=4, Cout=8, 16x16.
    N, Cin, Cout, H, W = 2, 4, 8, 16, 16
    kernel_size, stride = 3, 1

    x = jax.random.normal(kx, (N, Cin, H, W), dtype=jnp.float32)

    fan_in = Cin * kernel_size * kernel_size
    bound = 1.0 / np.sqrt(fan_in)
    params = {
        "weight": jax.random.uniform(kw_, (Cout, Cin, kernel_size, kernel_size),
                                     jnp.float32, -bound, bound),
        "bias": jax.random.uniform(kb, (Cout,), jnp.float32, -bound, bound),
    }

    # 1) Default perf path: bf16 MXU inputs, f32 accumulation.
    y_bf16 = conv_forward(x, params, kernel_size=kernel_size, stride=stride,
                          bn=False, act=True)
    jax.block_until_ready(y_bf16)
    y_ref = _reference(x, params, kernel_size=kernel_size, stride=stride,
                       bn=False, act=True)
    np.testing.assert_allclose(np.asarray(y_bf16), np.asarray(y_ref),
                               rtol=5e-2, atol=5e-2)

    # 2) f32 compute path: tighter numeric check of the fused kernel itself.
    y_f32 = conv_forward(x, params, kernel_size=kernel_size, stride=stride,
                         bn=False, act=True, compute_dtype=jnp.float32)
    np.testing.assert_allclose(np.asarray(y_f32), np.asarray(y_ref),
                               rtol=1e-2, atol=1e-2)

    # 3) BN + ReLU path (BN folded into weight/bias), f32 compute.
    bn_params = {
        "weight": params["weight"],
        "bn_gamma": jax.random.uniform(kg, (Cout,), jnp.float32, 0.5, 1.5),
        "bn_beta": jax.random.uniform(kbt, (Cout,), jnp.float32, -0.5, 0.5),
        "bn_mean": jax.random.normal(km, (Cout,), jnp.float32) * 0.1,
        "bn_var": jax.random.uniform(kv, (Cout,), jnp.float32, 0.5, 1.5),
    }
    y_bn = conv_forward(x, bn_params, kernel_size=kernel_size, stride=stride,
                        bn=True, act=True, compute_dtype=jnp.float32)
    y_bn_ref = _reference(x, bn_params, kernel_size=kernel_size, stride=stride,
                          bn=True, act=True)
    np.testing.assert_allclose(np.asarray(y_bn), np.asarray(y_bn_ref),
                               rtol=1e-2, atol=1e-2)

    # 4) 1x1 conv, no activation (exercises the halo-free kernel variant).
    params1 = {
        "weight": jax.random.uniform(kw1, (Cout, Cin, 1, 1), jnp.float32, -0.5, 0.5),
        "bias": jax.random.uniform(kb1, (Cout,), jnp.float32, -0.5, 0.5),
    }
    y1 = conv_forward(x, params1, kernel_size=1, stride=1, bn=False, act=False,
                      compute_dtype=jnp.float32)
    y1_ref = _reference(x, params1, kernel_size=1, stride=1, bn=False, act=False)
    np.testing.assert_allclose(np.asarray(y1), np.asarray(y1_ref),
                               rtol=1e-2, atol=1e-2)

    print("KERNEL_OK")
</pallas_src>

<mosaic_0001>
module attributes {stable_mosaic.version = 11 : i64} {
  func.func @_fused_conv_kernel(%arg0: i32, %arg1: i32, %arg2: i32, %arg3: memref<1x16x18x8xbf16, #tpu.memory_space<vmem>>, %arg4: memref<1x16x18x8xbf16, #tpu.memory_space<vmem>>, %arg5: memref<3x3x8x128xbf16, #tpu.memory_space<vmem>>, %arg6: memref<1x128xf32, #tpu.memory_space<vmem>>, %arg7: memref<1x256x128xf32, #tpu.memory_space<vmem>>) attributes {dimension_semantics = [#tpu.dimension_semantics<parallel>, #tpu.dimension_semantics<parallel>, #tpu.dimension_semantics<parallel>], iteration_bounds = array<i64: 1, 2, 1>, scalar_prefetch = 0 : i64, scratch_operands = 0 : i64, tpu.core_type = #tpu.core_type<tc>, window_params = [{transform_indices = @transform_0, window_bounds = array<i64: 1, 16, 18, 8>}, {transform_indices = @transform_1, window_bounds = array<i64: 1, 16, 18, 8>}, {transform_indices = @transform_2, window_bounds = array<i64: 3, 3, 8, 128>}, {transform_indices = @transform_3, window_bounds = array<i64: 1, 128>}, {transform_indices = @transform_4, window_bounds = array<i64: 1, 256, 128>}]} {
    %c0 = arith.constant 0 : index
    %c0_0 = arith.constant 0 : index
    %c0_1 = arith.constant 0 : index
    %c0_2 = arith.constant 0 : index
    %0 = vector.load %arg3[%c0, %c0_0, %c0_1, %c0_2] : memref<1x16x18x8xbf16, #tpu.memory_space<vmem>>, vector<1x16x18x8xbf16>
    %1 = vector.shape_cast %0 : vector<1x16x18x8xbf16> to vector<16x18x8xbf16>
    %c0_3 = arith.constant 0 : index
    %c0_4 = arith.constant 0 : index
    %c0_5 = arith.constant 0 : index
    %c0_6 = arith.constant 0 : index
    %2 = vector.load %arg4[%c0_3, %c0_4, %c0_5, %c0_6] : memref<1x16x18x8xbf16, #tpu.memory_space<vmem>>, vector<1x2x18x8xbf16>
    %3 = vector.shape_cast %2 : vector<1x2x18x8xbf16> to vector<2x18x8xbf16>
    %4 = tpu.concatenate %1, %3 in 0 : vector<16x18x8xbf16>, vector<2x18x8xbf16> -> vector<18x18x8xbf16>
    %5 = vector.extract_strided_slice %4 {offsets = [0, 0, 0], sizes = [16, 16, 8], strides = [1, 1, 1]} : vector<18x18x8xbf16> to vector<16x16x8xbf16>
    %6 = vector.shape_cast %5 : vector<16x16x8xbf16> to vector<256x8xbf16>
    %c0_7 = arith.constant 0 : index
    %c0_8 = arith.constant 0 : index
    %c0_9 = arith.constant 0 : index
    %c0_10 = arith.constant 0 : index
    %7 = vector.load %arg5[%c0_7, %c0_8, %c0_9, %c0_10] : memref<3x3x8x128xbf16, #tpu.memory_space<vmem>>, vector<1x1x8x128xbf16>
    %8 = vector.shape_cast %7 : vector<1x1x8x128xbf16> to vector<8x128xbf16>
    %cst = arith.constant dense<0.000000e+00> : vector<256x128xf32>
    %9 = tpu.matmul %6, %8, %cst {dimension_numbers = #tpu.dot_dimension_numbers<[1], [0], [0], [1], [0, 0, 1, 1], [], []>} : vector<256x8xbf16>, vector<8x128xbf16>, vector<256x128xf32> -> vector<256x128xf32>
    %10 = vector.extract_strided_slice %4 {offsets = [0, 1, 0], sizes = [16, 16, 8], strides = [1, 1, 1]} : vector<18x18x8xbf16> to vector<16x16x8xbf16>
    %11 = vector.shape_cast %10 : vector<16x16x8xbf16> to vector<256x8xbf16>
    %c0_11 = arith.constant 0 : index
    %c1 = arith.constant 1 : index
    %c0_12 = arith.constant 0 : index
    %c0_13 = arith.constant 0 : index
    %12 = vector.load %arg5[%c0_11, %c1, %c0_12, %c0_13] : memref<3x3x8x128xbf16, #tpu.memory_space<vmem>>, vector<1x1x8x128xbf16>
    %13 = vector.shape_cast %12 : vector<1x1x8x128xbf16> to vector<8x128xbf16>
    %cst_14 = arith.constant dense<0.000000e+00> : vector<256x128xf32>
    %14 = tpu.matmul %11, %13, %cst_14 {dimension_numbers = #tpu.dot_dimension_numbers<[1], [0], [0], [1], [0, 0, 1, 1], [], []>} : vector<256x8xbf16>, vector<8x128xbf16>, vector<256x128xf32> -> vector<256x128xf32>
    %15 = arith.addf %9, %14 : vector<256x128xf32>
    %16 = vector.extract_strided_slice %4 {offsets = [0, 2, 0], sizes = [16, 16, 8], strides = [1, 1, 1]} : vector<18x18x8xbf16> to vector<16x16x8xbf16>
    %17 = vector.shape_cast %16 : vector<16x16x8xbf16> to vector<256x8xbf16>
    %c0_15 = arith.constant 0 : index
    %c2 = arith.constant 2 : index
    %c0_16 = arith.constant 0 : index
    %c0_17 = arith.constant 0 : index
    %18 = vector.load %arg5[%c0_15, %c2, %c0_16, %c0_17] : memref<3x3x8x128xbf16, #tpu.memory_space<vmem>>, vector<1x1x8x128xbf16>
    %19 = vector.shape_cast %18 : vector<1x1x8x128xbf16> to vector<8x128xbf16>
    %cst_18 = arith.constant dense<0.000000e+00> : vector<256x128xf32>
    %20 = tpu.matmul %17, %19, %cst_18 {dimension_numbers = #tpu.dot_dimension_numbers<[1], [0], [0], [1], [0, 0, 1, 1], [], []>} : vector<256x8xbf16>, vector<8x128xbf16>, vector<256x128xf32> -> vector<256x128xf32>
    %21 = arith.addf %15, %20 : vector<256x128xf32>
    %22 = vector.extract_strided_slice %4 {offsets = [1, 0, 0], sizes = [16, 16, 8], strides = [1, 1, 1]} : vector<18x18x8xbf16> to vector<16x16x8xbf16>
    %23 = vector.shape_cast %22 : vector<16x16x8xbf16> to vector<256x8xbf16>
    %c1_19 = arith.constant 1 : index
    %c0_20 = arith.constant 0 : index
    %c0_21 = arith.constant 0 : index
    %c0_22 = arith.constant 0 : index
    %24 = vector.load %arg5[%c1_19, %c0_20, %c0_21, %c0_22] : memref<3x3x8x128xbf16, #tpu.memory_space<vmem>>, vector<1x1x8x128xbf16>
    %25 = vector.shape_cast %24 : vector<1x1x8x128xbf16> to vector<8x128xbf16>
    %cst_23 = arith.constant dense<0.000000e+00> : vector<256x128xf32>
    %26 = tpu.matmul %23, %25, %cst_23 {dimension_numbers = #tpu.dot_dimension_numbers<[1], [0], [0], [1], [0, 0, 1, 1], [], []>} : vector<256x8xbf16>, vector<8x128xbf16>, vector<256x128xf32> -> vector<256x128xf32>
    %27 = arith.addf %21, %26 : vector<256x128xf32>
    %28 = vector.extract_strided_slice %4 {offsets = [1, 1, 0], sizes = [16, 16, 8], strides = [1, 1, 1]} : vector<18x18x8xbf16> to vector<16x16x8xbf16>
    %29 = vector.shape_cast %28 : vector<16x16x8xbf16> to vector<256x8xbf16>
    %c1_24 = arith.constant 1 : index
    %c1_25 = arith.constant 1 : index
    %c0_26 = arith.constant 0 : index
    %c0_27 = arith.constant 0 : index
    %30 = vector.load %arg5[%c1_24, %c1_25, %c0_26, %c0_27] : memref<3x3x8x128xbf16, #tpu.memory_space<vmem>>, vector<1x1x8x128xbf16>
    %31 = vector.shape_cast %30 : vector<1x1x8x128xbf16> to vector<8x128xbf16>
    %cst_28 = arith.constant dense<0.000000e+00> : vector<256x128xf32>
    %32 = tpu.matmul %29, %31, %cst_28 {dimension_numbers = #tpu.dot_dimension_numbers<[1], [0], [0], [1], [0, 0, 1, 1], [], []>} : vector<256x8xbf16>, vector<8x128xbf16>, vector<256x128xf32> -> vector<256x128xf32>
    %33 = arith.addf %27, %32 : vector<256x128xf32>
    %34 = vector.extract_strided_slice %4 {offsets = [1, 2, 0], sizes = [16, 16, 8], strides = [1, 1, 1]} : vector<18x18x8xbf16> to vector<16x16x8xbf16>
    %35 = vector.shape_cast %34 : vector<16x16x8xbf16> to vector<256x8xbf16>
    %c1_29 = arith.constant 1 : index
    %c2_30 = arith.constant 2 : index
    %c0_31 = arith.constant 0 : index
    %c0_32 = arith.constant 0 : index
    %36 = vector.load %arg5[%c1_29, %c2_30, %c0_31, %c0_32] : memref<3x3x8x128xbf16, #tpu.memory_space<vmem>>, vector<1x1x8x128xbf16>
    %37 = vector.shape_cast %36 : vector<1x1x8x128xbf16> to vector<8x128xbf16>
    %cst_33 = arith.constant dense<0.000000e+00> : vector<256x128xf32>
    %38 = tpu.matmul %35, %37, %cst_33 {dimension_numbers = #tpu.dot_dimension_numbers<[1], [0], [0], [1], [0, 0, 1, 1], [], []>} : vector<256x8xbf16>, vector<8x128xbf16>, vector<256x128xf32> -> vector<256x128xf32>
    %39 = arith.addf %33, %38 : vector<256x128xf32>
    %40 = vector.extract_strided_slice %4 {offsets = [2, 0, 0], sizes = [16, 16, 8], strides = [1, 1, 1]} : vector<18x18x8xbf16> to vector<16x16x8xbf16>
    %41 = vector.shape_cast %40 : vector<16x16x8xbf16> to vector<256x8xbf16>
    %c2_34 = arith.constant 2 : index
    %c0_35 = arith.constant 0 : index
    %c0_36 = arith.constant 0 : index
    %c0_37 = arith.constant 0 : index
    %42 = vector.load %arg5[%c2_34, %c0_35, %c0_36, %c0_37] : memref<3x3x8x128xbf16, #tpu.memory_space<vmem>>, vector<1x1x8x128xbf16>
    %43 = vector.shape_cast %42 : vector<1x1x8x128xbf16> to vector<8x128xbf16>
    %cst_38 = arith.constant dense<0.000000e+00> : vector<256x128xf32>
    %44 = tpu.matmul %41, %43, %cst_38 {dimension_numbers = #tpu.dot_dimension_numbers<[1], [0], [0], [1], [0, 0, 1, 1], [], []>} : vector<256x8xbf16>, vector<8x128xbf16>, vector<256x128xf32> -> vector<256x128xf32>
    %45 = arith.addf %39, %44 : vector<256x128xf32>
    %46 = vector.extract_strided_slice %4 {offsets = [2, 1, 0], sizes = [16, 16, 8], strides = [1, 1, 1]} : vector<18x18x8xbf16> to vector<16x16x8xbf16>
    %47 = vector.shape_cast %46 : vector<16x16x8xbf16> to vector<256x8xbf16>
    %c2_39 = arith.constant 2 : index
    %c1_40 = arith.constant 1 : index
    %c0_41 = arith.constant 0 : index
    %c0_42 = arith.constant 0 : index
    %48 = vector.load %arg5[%c2_39, %c1_40, %c0_41, %c0_42] : memref<3x3x8x128xbf16, #tpu.memory_space<vmem>>, vector<1x1x8x128xbf16>
    %49 = vector.shape_cast %48 : vector<1x1x8x128xbf16> to vector<8x128xbf16>
    %cst_43 = arith.constant dense<0.000000e+00> : vector<256x128xf32>
    %50 = tpu.matmul %47, %49, %cst_43 {dimension_numbers = #tpu.dot_dimension_numbers<[1], [0], [0], [1], [0, 0, 1, 1], [], []>} : vector<256x8xbf16>, vector<8x128xbf16>, vector<256x128xf32> -> vector<256x128xf32>
    %51 = arith.addf %45, %50 : vector<256x128xf32>
    %52 = vector.extract_strided_slice %4 {offsets = [2, 2, 0], sizes = [16, 16, 8], strides = [1, 1, 1]} : vector<18x18x8xbf16> to vector<16x16x8xbf16>
    %53 = vector.shape_cast %52 : vector<16x16x8xbf16> to vector<256x8xbf16>
    %c2_44 = arith.constant 2 : index
    %c2_45 = arith.constant 2 : index
    %c0_46 = arith.constant 0 : index
    %c0_47 = arith.constant 0 : index
    %54 = vector.load %arg5[%c2_44, %c2_45, %c0_46, %c0_47] : memref<3x3x8x128xbf16, #tpu.memory_space<vmem>>, vector<1x1x8x128xbf16>
    %55 = vector.shape_cast %54 : vector<1x1x8x128xbf16> to vector<8x128xbf16>
    %cst_48 = arith.constant dense<0.000000e+00> : vector<256x128xf32>
    %56 = tpu.matmul %53, %55, %cst_48 {dimension_numbers = #tpu.dot_dimension_numbers<[1], [0], [0], [1], [0, 0, 1, 1], [], []>} : vector<256x8xbf16>, vector<8x128xbf16>, vector<256x128xf32> -> vector<256x128xf32>
    %57 = arith.addf %51, %56 : vector<256x128xf32>
    %c0_49 = arith.constant 0 : index
    %c0_50 = arith.constant 0 : index
    %58 = vector.load %arg6[%c0_49, %c0_50] : memref<1x128xf32, #tpu.memory_space<vmem>>, vector<1x128xf32>
    %59 = vector.broadcast %58 : vector<1x128xf32> to vector<256x128xf32>
    %60 = arith.addf %57, %59 : vector<256x128xf32>
    %cst_51 = arith.constant 0.000000e+00 : f32
    %61 = vector.broadcast %cst_51 : f32 to vector<256x128xf32>
    %62 = arith.maximumf %60, %61 : vector<256x128xf32>
    %63 = vector.shape_cast %62 : vector<256x128xf32> to vector<1x256x128xf32>
    %c0_52 = arith.constant 0 : index
    %c0_53 = arith.constant 0 : index
    %c0_54 = arith.constant 0 : index
    %64 = vector.load %arg7[%c0_52, %c0_53, %c0_54] : memref<1x256x128xf32, #tpu.memory_space<vmem>>, vector<1x256x128xf32>
    tpu.vector_store %arg7[%c0_52, %c0_53, %c0_54], %63 {strides = array<i32>} : memref<1x256x128xf32, #tpu.memory_space<vmem>>, vector<1x256x128xf32>,
    return
  }
  func.func @transform_0(%arg0: i32, %arg1: i32, %arg2: i32) -> (i32, i32, i32, i32) {
    %c0_i32 = arith.constant 0 : i32
    %c0_i32_0 = arith.constant 0 : i32
    %c0_i32_1 = arith.constant 0 : i32
    return %arg1, %arg2, %c0_i32, %c0_i32_0 : i32, i32, i32, i32
  }
  func.func @transform_1(%arg0: i32, %arg1: i32, %arg2: i32) -> (i32, i32, i32, i32) {
    %c1_i32 = arith.constant 1 : i32
    %0 = arith.addi %arg2, %c1_i32 : i32
    %c0_i32 = arith.constant 0 : i32
    %c0_i32_0 = arith.constant 0 : i32
    %c0_i32_1 = arith.constant 0 : i32
    return %arg1, %0, %c0_i32, %c0_i32_0 : i32, i32, i32, i32
  }
  func.func @transform_2(%arg0: i32, %arg1: i32, %arg2: i32) -> (i32, i32, i32, i32) {
    %c0_i32 = arith.constant 0 : i32
    %c0_i32_0 = arith.constant 0 : i32
    %c0_i32_1 = arith.constant 0 : i32
    %c0_i32_2 = arith.constant 0 : i32
    return %c0_i32, %c0_i32_0, %c0_i32_1, %arg0 : i32, i32, i32, i32
  }
  func.func @transform_3(%arg0: i32, %arg1: i32, %arg2: i32) -> (i32, i32) {
    %c0_i32 = arith.constant 0 : i32
    %c0_i32_0 = arith.constant 0 : i32
    return %c0_i32, %arg0 : i32, i32
  }
  func.func @transform_4(%arg0: i32, %arg1: i32, %arg2: i32) -> (i32, i32, i32) {
    %c0_i32 = arith.constant 0 : i32
    return %arg1, %arg2, %arg0 : i32, i32, i32
  }
}

</mosaic_0001>

<llo_original>
// kernel: tpu_custom_call.1
$region0: #{tpu_custom_call.1}
  #allocation0 [shape = 'u32[]', space=smem, size = 0x4, offset = 0x4, fixed_abs, tag = 'smem constant byte address 0x4 - core index']
  #allocation1 [shape = 'u32[72,128]{1,0:T(1,128)}', space=vmem, size = 0x9000, scoped, tag = 'internal scratch']
  %s0 = inlined_call_operand.vmem [shape: bf16[2,32,18,8], index: 0, kind: input, shape index: {}]
  %s1 = inlined_call_operand.vmem [shape: bf16[2,32,18,8], index: 1, kind: input, shape index: {}]
  %s2 = inlined_call_operand.vmem [shape: bf16[3,3,8,128], index: 2, kind: input, shape index: {}]
  %s3 = inlined_call_operand.vmem [shape: f32[1,128], index: 3, kind: input, shape index: {}]
  %s4 = inlined_call_operand.hbm [shape: f32[2,256,128], index: 4, kind: output, shape index: {}]
  %s5 = sld [smem:[#allocation0]]
  $region49: #{tpu_custom_call.1} parent=0
    _
  %s7 = ssub.s32 1, %s5
  %s8 = scalar_select 0, %s7, %s5
  $region1: #{tpu_custom_call.1} parent=0
    #allocation2 [shape = 'u8[262144]{0}', space=vmem, size = 0x40000, scoped, tag = 'output window, operand 0']
    #allocation3 [shape = 's32[2]{0}', space=sflag, size = 0x8, scoped, tag = 'scoped memory for tpu_custom_call.1']
    %9 = vsyncpa [#allocation3], 0
    %s10 = scalar_lea.sflag [#allocation3], 1
    %11 = vsyncpa %s10, 0
    loop: start=0, step=1, limit=4
    $region2: #{tpu_custom_call.1} parent=1 // loop_pre_header
      _
    $region3: #{tpu_custom_call.1} parent=1 // loop_header
      %s13 = sphi 0, %s17
      %p14 = scmp.ge.s32.totalorder %s13, 4
      %s20 = sphi 0, %s39
      %s21 = sphi 0, %s35
      %s22 = sphi 0, %s31
      %s23 = sphi 0, %s20
      %s24 = sphi 0, %s21
      %s25 = sphi 0, %s22
      %s26 = sphi 0, %s23
      %s27 = sphi 0, %s24
      %s28 = sphi 0, %s25
      %s44 = sphi 0, %s46
      %s47 = sphi 0, %s44
      %s48 = sphi 0, %s47
      %s64 = sphi 0, %s48
      %s74 = sphi 0, %s76
      %s77 = sphi 0, %s74
      %s78 = sphi 0, %s77
      %s94 = sphi 0, %s78
      %s100 = sphi 0, %s102
      %s103 = sphi 0, %s100
      %s104 = sphi 0, %s103
      %s120 = sphi 0, %s104
      %s126 = sphi 0, %s128
      %s129 = sphi 0, %s126
      %s130 = sphi 0, %s129
      %s146 = sphi 0, %s130
      %s156 = sphi 0, %s158
      %s159 = sphi 0, %s156
      %s160 = sphi 0, %s159
      %s176 = sphi 0, %s160
    $region4: #{tpu_custom_call.1} parent=1 // loop_header_branch
      %16 = sbr.rel (%p14) target = $region8
    $region5: #{tpu_custom_call.1} parent=1 // loop_body
      %s18 = ssub.s32 %s13, 1
      %s19 = ssub.s32 %s13, 2
      %s29 = sadd.s32 1, %s22
      %p30 = scmp.ge.s32.totalorder %s29, 1
      %s31 = scalar_select %p30, 0, %s29
      %s32 = sadd.s32 1, %s21
      %s33 = scalar_select %p30, %s32, %s21
      %p34 = scmp.ge.s32.totalorder %s33, 2
      %s35 = scalar_select %p34, 0, %s33
      %s36 = sadd.s32 1, %s20
      %s37 = scalar_select %p34, %s36, %s20
      %p38 = scmp.ge.s32.totalorder %s37, 1
      %s39 = scalar_select %p38, 0, %s37
      %s40 = ssub.s32 %s21, %s35
      %s41 = ssub.s32 %s22, %s31
      %s42 = sor.u32 %s40, %s41
      %p43 = scmp.eq.s32.totalorder %s42, 0
      %s45 = sadd.s32 %s44, 1
      %s46 = scalar_select %p43, %s44, %s45
      %p49 = pneg %p43
      %p50 = scmp.eq.s32.totalorder %s13, 1
      %p51 = por %p49, %p50
      %p52 = scmp.ne.s32.totalorder %s44, %s47
      %p53 = scmp.eq.s32.totalorder %s13, 0
      %p54 = por %p52, %p53
      %p55 = scmp.ne.s32.totalorder %s44, %s47
      %p56 = scmp.eq.s32.totalorder %s18, 1
      %p57 = por %p55, %p56
      %p58 = scmp.ne.s32.totalorder %s47, %s48
      %p59 = scmp.eq.s32.totalorder %s18, 0
      %p60 = por %p58, %p59
      %p61 = scmp.ne.s32.totalorder %s47, %s48
      %p62 = scmp.eq.s32.totalorder %s19, 1
      %p63 = por %p61, %p62
      %p65 = scmp.ne.s32.totalorder %s48, %s64
      %p66 = scmp.eq.s32.totalorder %s19, 0
      %p67 = por %p65, %p66
      %s68 = sadd.s32 %s22, 1
      %s69 = sadd.s32 %s31, 1
      %s70 = ssub.s32 %s21, %s35
      %s71 = ssub.s32 %s68, %s69
      %s72 = sor.u32 %s70, %s71
      %p73 = scmp.eq.s32.totalorder %s72, 0
      %s75 = sadd.s32 %s74, 1
      %s76 = scalar_select %p73, %s74, %s75
      %p79 = pneg %p73
      %p80 = scmp.eq.s32.totalorder %s13, 1
      %p81 = por %p79, %p80
      %p82 = scmp.ne.s32.totalorder %s74, %s77
      %p83 = scmp.eq.s32.totalorder %s13, 0
      %p84 = por %p82, %p83
      %p85 = scmp.ne.s32.totalorder %s74, %s77
      %p86 = scmp.eq.s32.totalorder %s18, 1
      %p87 = por %p85, %p86
      %p88 = scmp.ne.s32.totalorder %s77, %s78
      %p89 = scmp.eq.s32.totalorder %s18, 0
      %p90 = por %p88, %p89
      %p91 = scmp.ne.s32.totalorder %s77, %s78
      %p92 = scmp.eq.s32.totalorder %s19, 1
      %p93 = por %p91, %p92
      %p95 = scmp.ne.s32.totalorder %s78, %s94
      %p96 = scmp.eq.s32.totalorder %s19, 0
      %p97 = por %p95, %p96
      %s98 = ssub.s32 %s20, %s39
      %p99 = scmp.eq.s32.totalorder %s98, 0
      %s101 = sadd.s32 %s100, 1
      %s102 = scalar_select %p99, %s100, %s101
      %p105 = pneg %p99
      %p106 = scmp.eq.s32.totalorder %s13, 1
      %p107 = por %p105, %p106
      %p108 = scmp.ne.s32.totalorder %s100, %s103
      %p109 = scmp.eq.s32.totalorder %s13, 0
      %p110 = por %p108, %p109
      %p111 = scmp.ne.s32.totalorder %s100, %s103
      %p112 = scmp.eq.s32.totalorder %s18, 1
      %p113 = por %p111, %p112
      %p114 = scmp.ne.s32.totalorder %s103, %s104
      %p115 = scmp.eq.s32.totalorder %s18, 0
      %p116 = por %p114, %p115
      %p117 = scmp.ne.s32.totalorder %s103, %s104
      %p118 = scmp.eq.s32.totalorder %s19, 1
      %p119 = por %p117, %p118
      %p121 = scmp.ne.s32.totalorder %s104, %s120
      %p122 = scmp.eq.s32.totalorder %s19, 0
      %p123 = por %p121, %p122
      %s124 = ssub.s32 %s20, %s39
      %p125 = scmp.eq.s32.totalorder %s124, 0
      %s127 = sadd.s32 %s126, 1
      %s128 = scalar_select %p125, %s126, %s127
      %p131 = pneg %p125
      %p132 = scmp.eq.s32.totalorder %s13, 1
      %p133 = por %p131, %p132
      %p134 = scmp.ne.s32.totalorder %s126, %s129
      %p135 = scmp.eq.s32.totalorder %s13, 0
      %p136 = por %p134, %p135
      %p137 = scmp.ne.s32.totalorder %s126, %s129
      %p138 = scmp.eq.s32.totalorder %s18, 1
      %p139 = por %p137, %p138
      %p140 = scmp.ne.s32.totalorder %s129, %s130
      %p141 = scmp.eq.s32.totalorder %s18, 0
      %p142 = por %p140, %p141
      %p143 = scmp.ne.s32.totalorder %s129, %s130
      %p144 = scmp.eq.s32.totalorder %s19, 1
      %p145 = por %p143, %p144
      %p147 = scmp.ne.s32.totalorder %s130, %s146
      %p148 = scmp.eq.s32.totalorder %s19, 0
      %p149 = por %p147, %p148
      %s150 = ssub.s32 %s21, %s35
      %s151 = ssub.s32 %s22, %s31
      %s152 = sor.u32 %s150, %s151
      %s153 = ssub.s32 %s20, %s39
      %s154 = sor.u32 %s152, %s153
      %p155 = scmp.eq.s32.totalorder %s154, 0
      %s157 = sadd.s32 %s156, 1
      %s158 = scalar_select %p155, %s156, %s157
      %p161 = pneg %p155
      %p162 = scmp.eq.s32.totalorder %s13, 1
      %p163 = por %p161, %p162
      %p164 = scmp.ne.s32.totalorder %s156, %s159
      %p165 = scmp.eq.s32.totalorder %s13, 0
      %p166 = por %p164, %p165
      %p167 = scmp.ne.s32.totalorder %s156, %s159
      %p168 = scmp.eq.s32.totalorder %s18, 1
      %p169 = por %p167, %p168
      %p170 = scmp.ne.s32.totalorder %s159, %s160
      %p171 = scmp.eq.s32.totalorder %s18, 0
      %p172 = por %p170, %p171
      %p173 = scmp.ne.s32.totalorder %s159, %s160
      %p174 = scmp.eq.s32.totalorder %s19, 1
      %p175 = por %p173, %p174
      %p177 = scmp.ne.s32.totalorder %s160, %s176
      %p178 = scmp.eq.s32.totalorder %s19, 0
      %p179 = por %p177, %p178
      %p180 = scmp.le.s32.totalorder 1, %s13
      %p181 = scmp.lt.s32.totalorder %s13, 3
      %p182 = pnand %p180, %p181
      %p183 = pneg %p182
      // Predicated region
      $region9: #{tpu_custom_call.1} parent=5 // pred_check
        _
      $region10: #{tpu_custom_call.1} parent=5 // pred_check_branch
        %185 = sbr.rel (%p182) target = $region12
      $region11: #{tpu_custom_call.1} parent=5 // pred_region
        %s186 = ssub.s32 %s13, 1
        // Predicated region
        $region13: #{tpu_custom_call.1} parent=11 // pred_check
          %p187 = pneg %p116
        $region14: #{tpu_custom_call.1} parent=11 // pred_check_branch
          %189 = sbr.rel (%p187) target = $region16
        $region15: #{tpu_custom_call.1} parent=11 // pred_region
          %p190 = scmp.lt.s32.totalorder %s23, 0
          %s191 = scalar_select %p190, %s23, 0
          %s192 = smul.addr %s191, 4
          %s193 = scalar_lea.vmem %s2, %s192
        $region16: #{tpu_custom_call.1} parent=11 // pred_fallthru
          _
        // Predicated region
        $region17: #{tpu_custom_call.1} parent=11 // pred_check
          %p194 = pneg %p142
        $region18: #{tpu_custom_call.1} parent=11 // pred_check_branch
          %196 = sbr.rel (%p194) target = $region20
        $region19: #{tpu_custom_call.1} parent=11 // pred_region
          %p197 = scmp.lt.s32.totalorder %s23, 0
          %s198 = scalar_select %p197, %s23, 0
          %s199 = scalar_lea.vmem %s3, %s198
        $region20: #{tpu_custom_call.1} parent=11 // pred_fallthru
          _
      $region12: #{tpu_custom_call.1} parent=5 // pred_fallthru
        _
      %p200 = scmp.lt.s32.totalorder %s13, 2
      // Predicated region
      $region21: #{tpu_custom_call.1} parent=5 // pred_check
        %p201 = pneg %p200
      $region22: #{tpu_custom_call.1} parent=5 // pred_check_branch
        %203 = sbr.rel (%p201) target = $region24
      $region23: #{tpu_custom_call.1} parent=5 // pred_region
        // Predicated region
        $region25: #{tpu_custom_call.1} parent=23 // pred_check
          %p204 = pneg %p54
        $region26: #{tpu_custom_call.1} parent=23 // pred_check_branch
          %206 = sbr.rel (%p204) target = $region28
        $region27: #{tpu_custom_call.1} parent=23 // pred_region
          %s207 = smul.u32 16, %s22
          %p208 = scmp.lt.s32.totalorder %s21, 1
          %s209 = scalar_select %p208, %s21, 1
          %p210 = scmp.lt.s32.totalorder %s207, 31
          %s211 = scalar_select %p210, %s207, 31
          %s212 = smul.addr %s211, 3
          %s213 = smul.addr %s209, 96
          %s214 = sadd.s32 %s212, %s213
          %s215 = smul.addr %s214, 4
          %s216 = scalar_lea.vmem %s0, %s215
          %s217 = smul.u32 16, %s22
        $region28: #{tpu_custom_call.1} parent=23 // pred_fallthru
          _
        // Predicated region
        $region29: #{tpu_custom_call.1} parent=23 // pred_check
          %p218 = pneg %p84
        $region30: #{tpu_custom_call.1} parent=23 // pred_check_branch
          %220 = sbr.rel (%p218) target = $region32
        $region31: #{tpu_custom_call.1} parent=23 // pred_region
          %s221 = sadd.s32 %s22, 1
          %s222 = smul.u32 16, %s221
          %p223 = scmp.lt.s32.totalorder %s21, 1
          %s224 = scalar_select %p223, %s21, 1
          %p225 = scmp.lt.s32.totalorder %s222, 31
          %s226 = scalar_select %p225, %s222, 31
          %s227 = smul.addr %s226, 3
          %s228 = smul.addr %s224, 96
          %s229 = sadd.s32 %s227, %s228
          %s230 = smul.addr %s229, 4
          %s231 = scalar_lea.vmem %s1, %s230
          %s232 = sadd.s32 %s22, 1
          %s233 = smul.u32 16, %s232
        $region32: #{tpu_custom_call.1} parent=23 // pred_fallthru
          _
      $region24: #{tpu_custom_call.1} parent=5 // pred_fallthru
        _
      %p234 = scmp.le.s32.totalorder 1, %s13
      %p235 = scmp.lt.s32.totalorder %s13, 3
      %p236 = pnand %p234, %p235
      %p237 = pneg %p236
      // Predicated region
      $region33: #{tpu_custom_call.1} parent=5 // pred_check
        _
      $region34: #{tpu_custom_call.1} parent=5 // pred_check_branch
        %239 = sbr.rel (%p236) target = $region36
      $region35: #{tpu_custom_call.1} parent=5 // pred_region
        %s240 = ssub.s32 %s13, 1
        %s241 = smul.u32 16, %s25
        %p242 = scmp.lt.s32.totalorder %s24, 1
        %s243 = scalar_select %p242, %s24, 1
        %p244 = scmp.lt.s32.totalorder %s241, 31
        %s245 = scalar_select %p244, %s241, 31
        %s246 = smul.addr %s245, 3
        %s247 = smul.addr %s243, 96
        %s248 = sadd.s32 %s246, %s247
        %s249 = smul.addr %s248, 4
        %s250 = scalar_lea.vmem %s0, %s249
        %p251 = pneg %p60
        %p252 = pneg %p57
        %s253 = sadd.s32 %s25, 1
        %s254 = smul.u32 16, %s253
        %p255 = scmp.lt.s32.totalorder %s24, 1
        %s256 = scalar_select %p255, %s24, 1
        %p257 = scmp.lt.s32.totalorder %s254, 31
        %s258 = scalar_select %p257, %s254, 31
        %s259 = smul.addr %s258, 3
        %s260 = smul.addr %s256, 96
        %s261 = sadd.s32 %s259, %s260
        %s262 = smul.addr %s261, 4
        %s263 = scalar_lea.vmem %s1, %s262
        %p264 = pneg %p90
        %p265 = pneg %p87
        %p266 = scmp.lt.s32.totalorder %s23, 0
        %s267 = scalar_select %p266, %s23, 0
        %s268 = smul.addr %s267, 4
        %s269 = scalar_lea.vmem %s2, %s268
        %p270 = pneg %p116
        %p271 = pneg %p113
        %p272 = scmp.lt.s32.totalorder %s23, 0
        %s273 = scalar_select %p272, %s23, 0
        %s274 = scalar_lea.vmem %s3, %s273
        %p275 = pneg %p142
        %p276 = pneg %p139
        %p277 = pneg %p172
        %p278 = pneg %p169
        %s279 = sand.u32 %s159, 1
        %s280 = scalar_lea.sflag [#allocation3], %s279
        %s281 = sand.u32 %s159, 1
        %s282 = smul.addr %s281, 256
        %s283 = scalar_lea.vmem [#allocation2], %s282
        %s284 = smul.u32 16, %s25
        %p285 = scmp.lt.s32.totalorder %s24, 1
        %s286 = scalar_select %p285, %s24, 1
        %p287 = scmp.lt.s32.totalorder %s284, 31
        %s288 = scalar_select %p287, %s284, 31
        %s289 = smul.addr %s288, 3
        %s290 = smul.addr %s286, 96
        %s291 = sadd.s32 %s289, %s290
        %s292 = smul.addr %s291, 4
        %s293 = scalar_lea.vmem %s0, %s292
        %s294 = smul.u32 16, %s25
        %s295 = sadd.s32 %s25, 1
        %s296 = smul.u32 16, %s295
        %p297 = scmp.lt.s32.totalorder %s24, 1
        %s298 = scalar_select %p297, %s24, 1
        %p299 = scmp.lt.s32.totalorder %s296, 31
        %s300 = scalar_select %p299, %s296, 31
        %s301 = smul.addr %s300, 3
        %s302 = smul.addr %s298, 96
        %s303 = sadd.s32 %s301, %s302
        %s304 = smul.addr %s303, 4
        %s305 = scalar_lea.vmem %s1, %s304
        %s306 = sadd.s32 %s25, 1
        %s307 = smul.u32 16, %s306
        %p308 = scmp.lt.s32.totalorder %s23, 0
        %s309 = scalar_select %p308, %s23, 0
        %s310 = smul.addr %s309, 4
        %s311 = scalar_lea.vmem %s2, %s310
        %p312 = scmp.lt.s32.totalorder %s23, 0
        %s313 = scalar_select %p312, %s23, 0
        %s314 = scalar_lea.vmem %s3, %s313
        %s315 = smul.u32 32, %s25
        %v317 = vld [vmem:[%s293] sm:$0xf]
        %v318 = vld [vmem:[%s293 + $0x4] sm:$0xf]
        %v319 = vld [vmem:[%s293 + $0x8] sm:$0x1]
        %v320 = vld [vmem:[%s293 + $0xc] sm:$0xf]
        %v321 = vld [vmem:[%s293 + $0x10] sm:$0xf]
        %v322 = vld [vmem:[%s293 + $0x14] sm:$0x1]
        %v323 = vld [vmem:[%s293 + $0x18] sm:$0xf]
        %v324 = vld [vmem:[%s293 + $0x1c] sm:$0xf]
        %v325 = vld [vmem:[%s293 + $0x20] sm:$0x1]
        %v326 = vld [vmem:[%s293 + $0x24] sm:$0xf]
        %v327 = vld [vmem:[%s293 + $0x28] sm:$0xf]
        %v328 = vld [vmem:[%s293 + $0x2c] sm:$0x1]
        %v329 = vld [vmem:[%s293 + $0x30] sm:$0xf]
        %v330 = vld [vmem:[%s293 + $0x34] sm:$0xf]
        %v331 = vld [vmem:[%s293 + $0x38] sm:$0x1]
        %v332 = vld [vmem:[%s293 + $0x3c] sm:$0xf]
        %v333 = vld [vmem:[%s293 + $0x40] sm:$0xf]
        %v334 = vld [vmem:[%s293 + $0x44] sm:$0x1]
        %v335 = vld [vmem:[%s293 + $0x48] sm:$0xf]
        %v336 = vld [vmem:[%s293 + $0x4c] sm:$0xf]
        %v337 = vld [vmem:[%s293 + $0x50] sm:$0x1]
        %v338 = vld [vmem:[%s293 + $0x54] sm:$0xf]
        %v339 = vld [vmem:[%s293 + $0x58] sm:$0xf]
        %v340 = vld [vmem:[%s293 + $0x5c] sm:$0x1]
        %v341 = vld [vmem:[%s293 + $0x60] sm:$0xf]
        %v342 = vld [vmem:[%s293 + $0x64] sm:$0xf]
        %v343 = vld [vmem:[%s293 + $0x68] sm:$0x1]
        %v344 = vld [vmem:[%s293 + $0x6c] sm:$0xf]
        %v345 = vld [vmem:[%s293 + $0x70] sm:$0xf]
        %v346 = vld [vmem:[%s293 + $0x74] sm:$0x1]
        %v347 = vld [vmem:[%s293 + $0x78] sm:$0xf]
        %v348 = vld [vmem:[%s293 + $0x7c] sm:$0xf]
        %v349 = vld [vmem:[%s293 + $0x80] sm:$0x1]
        %v350 = vld [vmem:[%s293 + $0x84] sm:$0xf]
        %v351 = vld [vmem:[%s293 + $0x88] sm:$0xf]
        %v352 = vld [vmem:[%s293 + $0x8c] sm:$0x1]
        %v353 = vld [vmem:[%s293 + $0x90] sm:$0xf]
        %v354 = vld [vmem:[%s293 + $0x94] sm:$0xf]
        %v355 = vld [vmem:[%s293 + $0x98] sm:$0x1]
        %v356 = vld [vmem:[%s293 + $0x9c] sm:$0xf]
        %v357 = vld [vmem:[%s293 + $0xa0] sm:$0xf]
        %v358 = vld [vmem:[%s293 + $0xa4] sm:$0x1]
        %v359 = vld [vmem:[%s293 + $0xa8] sm:$0xf]
        %v360 = vld [vmem:[%s293 + $0xac] sm:$0xf]
        %v361 = vld [vmem:[%s293 + $0xb0] sm:$0x1]
        %v362 = vld [vmem:[%s293 + $0xb4] sm:$0xf]
        %v363 = vld [vmem:[%s293 + $0xb8] sm:$0xf]
        %v364 = vld [vmem:[%s293 + $0xbc] sm:$0x1]
        %v365 = vld [vmem:[%s305] sm:$0xf]
        %v366 = vld [vmem:[%s305 + $0x4] sm:$0xf]
        %v367 = vld [vmem:[%s305 + $0x8] sm:$0x1]
        %v368 = vld [vmem:[%s305 + $0xc] sm:$0xf]
        %v369 = vld [vmem:[%s305 + $0x10] sm:$0xf]
        %v370 = vld [vmem:[%s305 + $0x14] sm:$0x1]
        %v371 = vld [vmem:[%s311] sm:$0xf]
        %vm372 = vsmask.f32 3328
        %vm373 = vsmask.f32 7440
        %vm374 = vmor %vm372, %vm373
        %v376 = vshrl.u32 %v317, 16
        %v378 = vrot.slane %v376, 4
        %v379 = vshll.u32 %v317, 16
        %v381 = vrot.slane %v379, 5
        %v382 = vor.u32 %v378, %v381
        %v383 = vrot.slane %v382, 4
        %v385 = vshll.u32 %v318, 16
        %v387 = vrot.slane %v385, 5
        %v388 = vsel %vm374, %v383, %v387
        %v389 = vshrl.u32 %v318, 16
        %v391 = vrot.slane %v389, 4
        %v392 = vor.u32 %v391, %v387
        %v393 = vrot.slane %v392, 4
        %v395 = vshll.u32 %v319, 16
        %v397 = vrot.slane %v395, 5
        %v398 = vsel %vm374, %v393, %v397
        %v400 = vshrl.u32 %v320, 16
        %v402 = vrot.slane %v400, 4
        %v403 = vshll.u32 %v320, 16
        %v405 = vrot.slane %v403, 5
        %v406 = vor.u32 %v402, %v405
        %v407 = vrot.slane %v406, 4
        %v409 = vshll.u32 %v321, 16
        %v411 = vrot.slane %v409, 5
        %v412 = vsel %vm374, %v407, %v411
        %v413 = vshrl.u32 %v321, 16
        %v415 = vrot.slane %v413, 4
        %v416 = vor.u32 %v415, %v411
        %v417 = vrot.slane %v416, 4
        %v419 = vshll.u32 %v322, 16
        %v421 = vrot.slane %v419, 5
        %v422 = vsel %vm374, %v417, %v421
        %v424 = vshrl.u32 %v323, 16
        %v426 = vrot.slane %v424, 4
        %v427 = vshll.u32 %v323, 16
        %v429 = vrot.slane %v427, 5
        %v430 = vor.u32 %v426, %v429
        %v431 = vrot.slane %v430, 4
        %v433 = vshll.u32 %v324, 16
        %v435 = vrot.slane %v433, 5
        %v436 = vsel %vm374, %v431, %v435
        %v437 = vshrl.u32 %v324, 16
        %v439 = vrot.slane %v437, 4
        %v440 = vor.u32 %v439, %v435
        %v441 = vrot.slane %v440, 4
        %v443 = vshll.u32 %v325, 16
        %v445 = vrot.slane %v443, 5
        %v446 = vsel %vm374, %v441, %v445
        %v448 = vshrl.u32 %v326, 16
        %v450 = vrot.slane %v448, 4
        %v451 = vshll.u32 %v326, 16
        %v453 = vrot.slane %v451, 5
        %v454 = vor.u32 %v450, %v453
        %v455 = vrot.slane %v454, 4
        %v457 = vshll.u32 %v327, 16
        %v459 = vrot.slane %v457, 5
        %v460 = vsel %vm374, %v455, %v459
        %v461 = vshrl.u32 %v327, 16
        %v463 = vrot.slane %v461, 4
        %v464 = vor.u32 %v463, %v459
        %v465 = vrot.slane %v464, 4
        %v467 = vshll.u32 %v328, 16
        %v469 = vrot.slane %v467, 5
        %v470 = vsel %vm374, %v465, %v469
        %v472 = vshrl.u32 %v329, 16
        %v474 = vrot.slane %v472, 4
        %v475 = vshll.u32 %v329, 16
        %v477 = vrot.slane %v475, 5
        %v478 = vor.u32 %v474, %v477
        %v479 = vrot.slane %v478, 4
        %v481 = vshll.u32 %v330, 16
        %v483 = vrot.slane %v481, 5
        %v484 = vsel %vm374, %v479, %v483
        %v485 = vshrl.u32 %v330, 16
        %v487 = vrot.slane %v485, 4
        %v488 = vor.u32 %v487, %v483
        %v489 = vrot.slane %v488, 4
        %v491 = vshll.u32 %v331, 16
        %v493 = vrot.slane %v491, 5
        %v494 = vsel %vm374, %v489, %v493
        %v496 = vshrl.u32 %v332, 16
        %v498 = vrot.slane %v496, 4
        %v499 = vshll.u32 %v332, 16
        %v501 = vrot.slane %v499, 5
        %v502 = vor.u32 %v498, %v501
        %v503 = vrot.slane %v502, 4
        %v505 = vshll.u32 %v333, 16
        %v507 = vrot.slane %v505, 5
        %v508 = vsel %vm374, %v503, %v507
        %v509 = vshrl.u32 %v333, 16
        %v511 = vrot.slane %v509, 4
        %v512 = vor.u32 %v511, %v507
        %v513 = vrot.slane %v512, 4
        %v515 = vshll.u32 %v334, 16
        %v517 = vrot.slane %v515, 5
        %v518 = vsel %vm374, %v513, %v517
        %v520 = vshrl.u32 %v335, 16
        %v522 = vrot.slane %v520, 4
        %v523 = vshll.u32 %v335, 16
        %v525 = vrot.slane %v523, 5
        %v526 = vor.u32 %v522, %v525
        %v527 = vrot.slane %v526, 4
        %v529 = vshll.u32 %v336, 16
        %v531 = vrot.slane %v529, 5
        %v532 = vsel %vm374, %v527, %v531
        %v533 = vshrl.u32 %v336, 16
        %v535 = vrot.slane %v533, 4
        %v536 = vor.u32 %v535, %v531
        %v537 = vrot.slane %v536, 4
        %v539 = vshll.u32 %v337, 16
        %v541 = vrot.slane %v539, 5
        %v542 = vsel %vm374, %v537, %v541
        %v544 = vshrl.u32 %v338, 16
        %v546 = vrot.slane %v544, 4
        %v547 = vshll.u32 %v338, 16
        %v549 = vrot.slane %v547, 5
        %v550 = vor.u32 %v546, %v549
        %v551 = vrot.slane %v550, 4
        %v553 = vshll.u32 %v339, 16
        %v555 = vrot.slane %v553, 5
        %v556 = vsel %vm374, %v551, %v555
        %v557 = vshrl.u32 %v339, 16
        %v559 = vrot.slane %v557, 4
        %v560 = vor.u32 %v559, %v555
        %v561 = vrot.slane %v560, 4
        %v563 = vshll.u32 %v340, 16
        %v565 = vrot.slane %v563, 5
        %v566 = vsel %vm374, %v561, %v565
        %v568 = vshrl.u32 %v341, 16
        %v570 = vrot.slane %v568, 4
        %v571 = vshll.u32 %v341, 16
        %v573 = vrot.slane %v571, 5
        %v574 = vor.u32 %v570, %v573
        %v575 = vrot.slane %v574, 4
        %v577 = vshll.u32 %v342, 16
        %v579 = vrot.slane %v577, 5
        %v580 = vsel %vm374, %v575, %v579
        %v581 = vshrl.u32 %v342, 16
        %v583 = vrot.slane %v581, 4
        %v584 = vor.u32 %v583, %v579
        %v585 = vrot.slane %v584, 4
        %v587 = vshll.u32 %v343, 16
        %v589 = vrot.slane %v587, 5
        %v590 = vsel %vm374, %v585, %v589
        %v592 = vshrl.u32 %v344, 16
        %v594 = vrot.slane %v592, 4
        %v595 = vshll.u32 %v344, 16
        %v597 = vrot.slane %v595, 5
        %v598 = vor.u32 %v594, %v597
        %v599 = vrot.slane %v598, 4
        %v601 = vshll.u32 %v345, 16
        %v603 = vrot.slane %v601, 5
        %v604 = vsel %vm374, %v599, %v603
        %v605 = vshrl.u32 %v345, 16
        %v607 = vrot.slane %v605, 4
        %v608 = vor.u32 %v607, %v603
        %v609 = vrot.slane %v608, 4
        %v611 = vshll.u32 %v346, 16
        %v613 = vrot.slane %v611, 5
        %v614 = vsel %vm374, %v609, %v613
        %v616 = vshrl.u32 %v347, 16
        %v618 = vrot.slane %v616, 4
        %v619 = vshll.u32 %v347, 16
        %v621 = vrot.slane %v619, 5
        %v622 = vor.u32 %v618, %v621
        %v623 = vrot.slane %v622, 4
        %v625 = vshll.u32 %v348, 16
        %v627 = vrot.slane %v625, 5
        %v628 = vsel %vm374, %v623, %v627
        %v629 = vshrl.u32 %v348, 16
        %v631 = vrot.slane %v629, 4
        %v632 = vor.u32 %v631, %v627
        %v633 = vrot.slane %v632, 4
        %v635 = vshll.u32 %v349, 16
        %v637 = vrot.slane %v635, 5
        %v638 = vsel %vm374, %v633, %v637
        %v640 = vshrl.u32 %v350, 16
        %v642 = vrot.slane %v640, 4
        %v643 = vshll.u32 %v350, 16
        %v645 = vrot.slane %v643, 5
        %v646 = vor.u32 %v642, %v645
        %v647 = vrot.slane %v646, 4
        %v649 = vshll.u32 %v351, 16
        %v651 = vrot.slane %v649, 5
        %v652 = vsel %vm374, %v647, %v651
        %v653 = vshrl.u32 %v351, 16
        %v655 = vrot.slane %v653, 4
        %v656 = vor.u32 %v655, %v651
        %v657 = vrot.slane %v656, 4
        %v659 = vshll.u32 %v352, 16
        %v661 = vrot.slane %v659, 5
        %v662 = vsel %vm374, %v657, %v661
        %v664 = vshrl.u32 %v353, 16
        %v666 = vrot.slane %v664, 4
        %v667 = vshll.u32 %v353, 16
        %v669 = vrot.slane %v667, 5
        %v670 = vor.u32 %v666, %v669
        %v671 = vrot.slane %v670, 4
        %v673 = vshll.u32 %v354, 16
        %v675 = vrot.slane %v673, 5
        %v676 = vsel %vm374, %v671, %v675
        %v677 = vshrl.u32 %v354, 16
        %v679 = vrot.slane %v677, 4
        %v680 = vor.u32 %v679, %v675
        %v681 = vrot.slane %v680, 4
        %v683 = vshll.u32 %v355, 16
        %v685 = vrot.slane %v683, 5
        %v686 = vsel %vm374, %v681, %v685
        %v688 = vshrl.u32 %v356, 16
        %v690 = vrot.slane %v688, 4
        %v691 = vshll.u32 %v356, 16
        %v693 = vrot.slane %v691, 5
        %v694 = vor.u32 %v690, %v693
        %v695 = vrot.slane %v694, 4
        %v697 = vshll.u32 %v357, 16
        %v699 = vrot.slane %v697, 5
        %v700 = vsel %vm374, %v695, %v699
        %v701 = vshrl.u32 %v357, 16
        %v703 = vrot.slane %v701, 4
        %v704 = vor.u32 %v703, %v699
        %v705 = vrot.slane %v704, 4
        %v707 = vshll.u32 %v358, 16
        %v709 = vrot.slane %v707, 5
        %v710 = vsel %vm374, %v705, %v709
        %v712 = vshrl.u32 %v359, 16
        %v714 = vrot.slane %v712, 4
        %v715 = vshll.u32 %v359, 16
        %v717 = vrot.slane %v715, 5
        %v718 = vor.u32 %v714, %v717
        %v719 = vrot.slane %v718, 4
        %v721 = vshll.u32 %v360, 16
        %v723 = vrot.slane %v721, 5
        %v724 = vsel %vm374, %v719, %v723
        %v725 = vshrl.u32 %v360, 16
        %v727 = vrot.slane %v725, 4
        %v728 = vor.u32 %v727, %v723
        %v729 = vrot.slane %v728, 4
        %v731 = vshll.u32 %v361, 16
        %v733 = vrot.slane %v731, 5
        %v734 = vsel %vm374, %v729, %v733
        %v736 = vshrl.u32 %v362, 16
        %v738 = vrot.slane %v736, 4
        %v739 = vshll.u32 %v362, 16
        %v741 = vrot.slane %v739, 5
        %v742 = vor.u32 %v738, %v741
        %v743 = vrot.slane %v742, 4
        %v745 = vshll.u32 %v363, 16
        %v747 = vrot.slane %v745, 5
        %v748 = vsel %vm374, %v743, %v747
        %v749 = vshrl.u32 %v363, 16
        %v751 = vrot.slane %v749, 4
        %v752 = vor.u32 %v751, %v747
        %v753 = vrot.slane %v752, 4
        %v755 = vshll.u32 %v364, 16
        %v757 = vrot.slane %v755, 5
        %v758 = vsel %vm374, %v753, %v757
        %s759 = scalar_lea.vmem %s311, 4
        %v760 = vld [vmem:[%s759] sm:$0xf]
        %v761 = vunpack.c.l.b16 %v388
        %v762 = vunpack.c.l.b16 %v398
        %v763 = vunpack.c.l.b16 %v412
        %v764 = vunpack.c.l.b16 %v422
        %v765 = vunpack.c.l.b16 %v436
        %v766 = vunpack.c.l.b16 %v446
        %v767 = vunpack.c.l.b16 %v460
        %v768 = vunpack.c.l.b16 %v470
        %v769 = vunpack.c.l.b16 %v484
        %v770 = vunpack.c.l.b16 %v494
        %v771 = vunpack.c.l.b16 %v508
        %v772 = vunpack.c.l.b16 %v518
        %v773 = vunpack.c.l.b16 %v532
        %v774 = vunpack.c.l.b16 %v542
        %v775 = vunpack.c.l.b16 %v556
        %v776 = vunpack.c.l.b16 %v566
        %v777 = vunpack.c.l.b16 %v580
        %v778 = vunpack.c.l.b16 %v590
        %v779 = vunpack.c.l.b16 %v604
        %v780 = vunpack.c.l.b16 %v614
        %v781 = vunpack.c.l.b16 %v628
        %v782 = vunpack.c.l.b16 %v638
        %v783 = vunpack.c.l.b16 %v652
        %v784 = vunpack.c.l.b16 %v662
        %v785 = vunpack.c.l.b16 %v676
        %v786 = vunpack.c.l.b16 %v686
        %v787 = vunpack.c.l.b16 %v700
        %v788 = vunpack.c.l.b16 %v710
        %v789 = vunpack.c.l.b16 %v724
        %v790 = vunpack.c.l.b16 %v734
        %v791 = vunpack.c.l.b16 %v748
        %v792 = vunpack.c.l.b16 %v758
        %v793 = vpack.c.b16 %v762, %v761
        %v794 = vpack.c.b16 %v764, %v763
        %v795 = vpack.c.b16 %v766, %v765
        %v796 = vpack.c.b16 %v768, %v767
        %v797 = vpack.c.b16 %v770, %v769
        %v798 = vpack.c.b16 %v772, %v771
        %v799 = vpack.c.b16 %v774, %v773
        %v800 = vpack.c.b16 %v776, %v775
        %v801 = vpack.c.b16 %v778, %v777
        %v802 = vpack.c.b16 %v780, %v779
        %v803 = vpack.c.b16 %v782, %v781
        %v804 = vpack.c.b16 %v784, %v783
        %v805 = vpack.c.b16 %v786, %v785
        %v806 = vpack.c.b16 %v788, %v787
        %v807 = vpack.c.b16 %v790, %v789
        %v808 = vpack.c.b16 %v792, %v791
        %vm809 = vcmask 64512
        %v811 = vsel %vm809, %v793, 0
        %v814 = vsel %vm809, %v794, 0
        %v817 = vsel %vm809, %v795, 0
        %v820 = vsel %vm809, %v796, 0
        %v823 = vsel %vm809, %v797, 0
        %v826 = vsel %vm809, %v798, 0
        %v829 = vsel %vm809, %v799, 0
        %v832 = vsel %vm809, %v800, 0
        %v835 = vsel %vm809, %v801, 0
        %v838 = vsel %vm809, %v802, 0
        %v841 = vsel %vm809, %v803, 0
        %v844 = vsel %vm809, %v804, 0
        %v847 = vsel %vm809, %v805, 0
        %v850 = vsel %vm809, %v806, 0
        %v853 = vsel %vm809, %v807, 0
        %v856 = vsel %vm809, %v808, 0
        %vm858 = vcmask 1043456
        %v860 = vsel %vm858, %v760, 0
        %862 = vmatpush.bf16.msra.mxu0 0
        %863 = vmatpush.bf16.msra.mxu0 0
        %864 = vmatpush.bf16.msra.mxu0 0
        %865 = vmatpush.bf16.msra.mxu0 0
        %866 = vmatpush.bf16.msra.mxu0 0
        %867 = vmatpush.bf16.msra.mxu0 0
        %868 = vmatpush.bf16.msra.mxu0 0
        %869 = vmatpush.bf16.msra.mxu0 %v860
        %870 = vmatmul.bf16.gmra.mxu0 %v811
        %v871 = vpop.f32.mrf.mxu0
        %v872 = vadd.f32 0.0, %v871
        %v873 = vpop.f32.mrf.mxu0
        %v874 = vadd.f32 0.0, %v873
        %875 = vmatmul.bf16.gmra.mxu0 %v814
        %v876 = vpop.f32.mrf.mxu0
        %v877 = vadd.f32 0.0, %v876
        %v878 = vpop.f32.mrf.mxu0
        %v879 = vadd.f32 0.0, %v878
        %880 = vmatmul.bf16.gmra.mxu0 %v817
        %v881 = vpop.f32.mrf.mxu0
        %v882 = vadd.f32 0.0, %v881
        %v883 = vpop.f32.mrf.mxu0
        %v884 = vadd.f32 0.0, %v883
        %885 = vmatmul.bf16.gmra.mxu0 %v820
        %v886 = vpop.f32.mrf.mxu0
        %v887 = vadd.f32 0.0, %v886
        %v888 = vpop.f32.mrf.mxu0
        %v889 = vadd.f32 0.0, %v888
        %890 = vmatmul.bf16.gmra.mxu0 %v823
        %v891 = vpop.f32.mrf.mxu0
        %v892 = vadd.f32 0.0, %v891
        %v893 = vpop.f32.mrf.mxu0
        %v894 = vadd.f32 0.0, %v893
        %895 = vmatmul.bf16.gmra.mxu0 %v826
        %v896 = vpop.f32.mrf.mxu0
        %v897 = vadd.f32 0.0, %v896
        %v898 = vpop.f32.mrf.mxu0
        %v899 = vadd.f32 0.0, %v898
        %900 = vmatmul.bf16.gmra.mxu0 %v829
        %v901 = vpop.f32.mrf.mxu0
        %v902 = vadd.f32 0.0, %v901
        %v903 = vpop.f32.mrf.mxu0
        %v904 = vadd.f32 0.0, %v903
        %905 = vmatmul.bf16.gmra.mxu0 %v832
        %v906 = vpop.f32.mrf.mxu0
        %v907 = vadd.f32 0.0, %v906
        %v908 = vpop.f32.mrf.mxu0
        %v909 = vadd.f32 0.0, %v908
        %910 = vmatmul.bf16.gmra.mxu0 %v835
        %v911 = vpop.f32.mrf.mxu0
        %v912 = vadd.f32 0.0, %v911
        %v913 = vpop.f32.mrf.mxu0
        %v914 = vadd.f32 0.0, %v913
        %915 = vmatmul.bf16.gmra.mxu0 %v838
        %v916 = vpop.f32.mrf.mxu0
        %v917 = vadd.f32 0.0, %v916
        %v918 = vpop.f32.mrf.mxu0
        %v919 = vadd.f32 0.0, %v918
        %920 = vmatmul.bf16.gmra.mxu0 %v841
        %v921 = vpop.f32.mrf.mxu0
        %v922 = vadd.f32 0.0, %v921
        %v923 = vpop.f32.mrf.mxu0
        %v924 = vadd.f32 0.0, %v923
        %925 = vmatmul.bf16.gmra.mxu0 %v844
        %v926 = vpop.f32.mrf.mxu0
        %v927 = vadd.f32 0.0, %v926
        %v928 = vpop.f32.mrf.mxu0
        %v929 = vadd.f32 0.0, %v928
        %930 = vmatmul.bf16.gmra.mxu0 %v847
        %v931 = vpop.f32.mrf.mxu0
        %v932 = vadd.f32 0.0, %v931
        %v933 = vpop.f32.mrf.mxu0
        %v934 = vadd.f32 0.0, %v933
        %935 = vmatmul.bf16.gmra.mxu0 %v850
        %v936 = vpop.f32.mrf.mxu0
        %v937 = vadd.f32 0.0, %v936
        %v938 = vpop.f32.mrf.mxu0
        %v939 = vadd.f32 0.0, %v938
        %940 = vmatmul.bf16.gmra.mxu0 %v853
        %v941 = vpop.f32.mrf.mxu0
        %v942 = vadd.f32 0.0, %v941
        %v943 = vpop.f32.mrf.mxu0
        %v944 = vadd.f32 0.0, %v943
        %945 = vmatmul.bf16.gmra.mxu0 %v856
        %v946 = vpop.f32.mrf.mxu0
        %v947 = vadd.f32 0.0, %v946
        %v948 = vpop.f32.mrf.mxu0
        %v949 = vadd.f32 0.0, %v948
        %950 = vdwg.mxu0
        %v983 = vunpack.c.l.b16 %v317
        %v984 = vunpack.c.l.b16 %v318
        %v985 = vunpack.c.l.b16 %v320
        %v986 = vunpack.c.l.b16 %v321
        %v987 = vunpack.c.l.b16 %v323
        %v988 = vunpack.c.l.b16 %v324
        %v989 = vunpack.c.l.b16 %v326
        %v990 = vunpack.c.l.b16 %v327
        %v991 = vunpack.c.l.b16 %v329
        %v992 = vunpack.c.l.b16 %v330
        %v993 = vunpack.c.l.b16 %v332
        %v994 = vunpack.c.l.b16 %v333
        %v995 = vunpack.c.l.b16 %v335
        %v996 = vunpack.c.l.b16 %v336
        %v997 = vunpack.c.l.b16 %v338
        %v998 = vunpack.c.l.b16 %v339
        %v999 = vunpack.c.l.b16 %v341
        %v1000 = vunpack.c.l.b16 %v342
        %v1001 = vunpack.c.l.b16 %v344
        %v1002 = vunpack.c.l.b16 %v345
        %v1003 = vunpack.c.l.b16 %v347
        %v1004 = vunpack.c.l.b16 %v348
        %v1005 = vunpack.c.l.b16 %v350
        %v1006 = vunpack.c.l.b16 %v351
        %v1007 = vunpack.c.l.b16 %v353
        %v1008 = vunpack.c.l.b16 %v354
        %v1009 = vunpack.c.l.b16 %v356
        %v1010 = vunpack.c.l.b16 %v357
        %v1011 = vunpack.c.l.b16 %v359
        %v1012 = vunpack.c.l.b16 %v360
        %v1013 = vunpack.c.l.b16 %v362
        %v1014 = vunpack.c.l.b16 %v363
        %v1015 = vpack.c.b16 %v984, %v983
        %v1016 = vpack.c.b16 %v986, %v985
        %v1017 = vpack.c.b16 %v988, %v987
        %v1018 = vpack.c.b16 %v990, %v989
        %v1019 = vpack.c.b16 %v992, %v991
        %v1020 = vpack.c.b16 %v994, %v993
        %v1021 = vpack.c.b16 %v996, %v995
        %v1022 = vpack.c.b16 %v998, %v997
        %v1023 = vpack.c.b16 %v1000, %v999
        %v1024 = vpack.c.b16 %v1002, %v1001
        %v1025 = vpack.c.b16 %v1004, %v1003
        %v1026 = vpack.c.b16 %v1006, %v1005
        %v1027 = vpack.c.b16 %v1008, %v1007
        %v1028 = vpack.c.b16 %v1010, %v1009
        %v1029 = vpack.c.b16 %v1012, %v1011
        %v1030 = vpack.c.b16 %v1014, %v1013
        %v1032 = vsel %vm809, %v1015, 0
        %v1035 = vsel %vm809, %v1016, 0
        %v1038 = vsel %vm809, %v1017, 0
        %v1041 = vsel %vm809, %v1018, 0
        %v1044 = vsel %vm809, %v1019, 0
        %v1047 = vsel %vm809, %v1020, 0
        %v1050 = vsel %vm809, %v1021, 0
        %v1053 = vsel %vm809, %v1022, 0
        %v1056 = vsel %vm809, %v1023, 0
        %v1059 = vsel %vm809, %v1024, 0
        %v1062 = vsel %vm809, %v1025, 0
        %v1065 = vsel %vm809, %v1026, 0
        %v1068 = vsel %vm809, %v1027, 0
        %v1071 = vsel %vm809, %v1028, 0
        %v1074 = vsel %vm809, %v1029, 0
        %v1077 = vsel %vm809, %v1030, 0
        %v1080 = vsel %vm858, %v371, 0
        %1082 = vmatpush.bf16.msra.mxu0 0
        %1083 = vmatpush.bf16.msra.mxu0 0
        %1084 = vmatpush.bf16.msra.mxu0 0
        %1085 = vmatpush.bf16.msra.mxu0 0
        %1086 = vmatpush.bf16.msra.mxu0 0
        %1087 = vmatpush.bf16.msra.mxu0 0
        %1088 = vmatpush.bf16.msra.mxu0 0
        %1089 = vmatpush.bf16.msra.mxu0 %v1080
        %1090 = vmatmul.bf16.gmra.mxu0 %v1032
        %v1091 = vpop.f32.mrf.mxu0
        %v1092 = vadd.f32 %v872, %v1091
        %v1093 = vpop.f32.mrf.mxu0
        %v1094 = vadd.f32 %v874, %v1093
        %1095 = vmatmul.bf16.gmra.mxu0 %v1035
        %v1096 = vpop.f32.mrf.mxu0
        %v1097 = vadd.f32 %v877, %v1096
        %v1098 = vpop.f32.mrf.mxu0
        %v1099 = vadd.f32 %v879, %v1098
        %1100 = vmatmul.bf16.gmra.mxu0 %v1038
        %v1101 = vpop.f32.mrf.mxu0
        %v1102 = vadd.f32 %v882, %v1101
        %v1103 = vpop.f32.mrf.mxu0
        %v1104 = vadd.f32 %v884, %v1103
        %1105 = vmatmul.bf16.gmra.mxu0 %v1041
        %v1106 = vpop.f32.mrf.mxu0
        %v1107 = vadd.f32 %v887, %v1106
        %v1108 = vpop.f32.mrf.mxu0
        %v1109 = vadd.f32 %v889, %v1108
        %1110 = vmatmul.bf16.gmra.mxu0 %v1044
        %v1111 = vpop.f32.mrf.mxu0
        %v1112 = vadd.f32 %v892, %v1111
        %v1113 = vpop.f32.mrf.mxu0
        %v1114 = vadd.f32 %v894, %v1113
        %1115 = vmatmul.bf16.gmra.mxu0 %v1047
        %v1116 = vpop.f32.mrf.mxu0
        %v1117 = vadd.f32 %v897, %v1116
        %v1118 = vpop.f32.mrf.mxu0
        %v1119 = vadd.f32 %v899, %v1118
        %1120 = vmatmul.bf16.gmra.mxu0 %v1050
        %v1121 = vpop.f32.mrf.mxu0
        %v1122 = vadd.f32 %v902, %v1121
        %v1123 = vpop.f32.mrf.mxu0
        %v1124 = vadd.f32 %v904, %v1123
        %1125 = vmatmul.bf16.gmra.mxu0 %v1053
        %v1126 = vpop.f32.mrf.mxu0
        %v1127 = vadd.f32 %v907, %v1126
        %v1128 = vpop.f32.mrf.mxu0
        %v1129 = vadd.f32 %v909, %v1128
        %1130 = vmatmul.bf16.gmra.mxu0 %v1056
        %v1131 = vpop.f32.mrf.mxu0
        %v1132 = vadd.f32 %v912, %v1131
        %v1133 = vpop.f32.mrf.mxu0
        %v1134 = vadd.f32 %v914, %v1133
        %1135 = vmatmul.bf16.gmra.mxu0 %v1059
        %v1136 = vpop.f32.mrf.mxu0
        %v1137 = vadd.f32 %v917, %v1136
        %v1138 = vpop.f32.mrf.mxu0
        %v1139 = vadd.f32 %v919, %v1138
        %1140 = vmatmul.bf16.gmra.mxu0 %v1062
        %v1141 = vpop.f32.mrf.mxu0
        %v1142 = vadd.f32 %v922, %v1141
        %v1143 = vpop.f32.mrf.mxu0
        %v1144 = vadd.f32 %v924, %v1143
        %1145 = vmatmul.bf16.gmra.mxu0 %v1065
        %v1146 = vpop.f32.mrf.mxu0
        %v1147 = vadd.f32 %v927, %v1146
        %v1148 = vpop.f32.mrf.mxu0
        %v1149 = vadd.f32 %v929, %v1148
        %1150 = vmatmul.bf16.gmra.mxu0 %v1068
        %v1151 = vpop.f32.mrf.mxu0
        %v1152 = vadd.f32 %v932, %v1151
        %v1153 = vpop.f32.mrf.mxu0
        %v1154 = vadd.f32 %v934, %v1153
        %1155 = vmatmul.bf16.gmra.mxu0 %v1071
        %v1156 = vpop.f32.mrf.mxu0
        %v1157 = vadd.f32 %v937, %v1156
        %v1158 = vpop.f32.mrf.mxu0
        %v1159 = vadd.f32 %v939, %v1158
        %1160 = vmatmul.bf16.gmra.mxu0 %v1074
        %v1161 = vpop.f32.mrf.mxu0
        %v1162 = vadd.f32 %v942, %v1161
        %v1163 = vpop.f32.mrf.mxu0
        %v1164 = vadd.f32 %v944, %v1163
        %1165 = vmatmul.bf16.gmra.mxu0 %v1077
        %v1166 = vpop.f32.mrf.mxu0
        %v1167 = vadd.f32 %v947, %v1166
        %v1168 = vpop.f32.mrf.mxu0
        %v1169 = vadd.f32 %v949, %v1168
        %1170 = vdwg.mxu0
        %vm1187 = vcmask 1042432
        %vm1188 = vcmask 1046532
        %vm1189 = vmor %vm1187, %vm1188
        %v1190 = vrot.slane %v317, 5
        %v1191 = vrot.slane %v1190, 4
        %v1192 = vrot.slane %v318, 5
        %v1193 = vsel %vm1189, %v1191, %v1192
        %v1194 = vrot.slane %v1192, 4
        %v1195 = vrot.slane %v319, 5
        %v1196 = vsel %vm1189, %v1194, %v1195
        %v1197 = vrot.slane %v320, 5
        %v1198 = vrot.slane %v1197, 4
        %v1199 = vrot.slane %v321, 5
        %v1200 = vsel %vm1189, %v1198, %v1199
        %v1201 = vrot.slane %v1199, 4
        %v1202 = vrot.slane %v322, 5
        %v1203 = vsel %vm1189, %v1201, %v1202
        %v1204 = vrot.slane %v323, 5
        %v1205 = vrot.slane %v1204, 4
        %v1206 = vrot.slane %v324, 5
        %v1207 = vsel %vm1189, %v1205, %v1206
        %v1208 = vrot.slane %v1206, 4
        %v1209 = vrot.slane %v325, 5
        %v1210 = vsel %vm1189, %v1208, %v1209
        %v1211 = vrot.slane %v326, 5
        %v1212 = vrot.slane %v1211, 4
        %v1213 = vrot.slane %v327, 5
        %v1214 = vsel %vm1189, %v1212, %v1213
        %v1215 = vrot.slane %v1213, 4
        %v1216 = vrot.slane %v328, 5
        %v1217 = vsel %vm1189, %v1215, %v1216
        %v1218 = vrot.slane %v329, 5
        %v1219 = vrot.slane %v1218, 4
        %v1220 = vrot.slane %v330, 5
        %v1221 = vsel %vm1189, %v1219, %v1220
        %v1222 = vrot.slane %v1220, 4
        %v1223 = vrot.slane %v331, 5
        %v1224 = vsel %vm1189, %v1222, %v1223
        %v1225 = vrot.slane %v332, 5
        %v1226 = vrot.slane %v1225, 4
        %v1227 = vrot.slane %v333, 5
        %v1228 = vsel %vm1189, %v1226, %v1227
        %v1229 = vrot.slane %v1227, 4
        %v1230 = vrot.slane %v334, 5
        %v1231 = vsel %vm1189, %v1229, %v1230
        %v1232 = vrot.slane %v335, 5
        %v1233 = vrot.slane %v1232, 4
        %v1234 = vrot.slane %v336, 5
        %v1235 = vsel %vm1189, %v1233, %v1234
        %v1236 = vrot.slane %v1234, 4
        %v1237 = vrot.slane %v337, 5
        %v1238 = vsel %vm1189, %v1236, %v1237
        %v1239 = vrot.slane %v338, 5
        %v1240 = vrot.slane %v1239, 4
        %v1241 = vrot.slane %v339, 5
        %v1242 = vsel %vm1189, %v1240, %v1241
        %v1243 = vrot.slane %v1241, 4
        %v1244 = vrot.slane %v340, 5
        %v1245 = vsel %vm1189, %v1243, %v1244
        %v1246 = vrot.slane %v341, 5
        %v1247 = vrot.slane %v1246, 4
        %v1248 = vrot.slane %v342, 5
        %v1249 = vsel %vm1189, %v1247, %v1248
        %v1250 = vrot.slane %v1248, 4
        %v1251 = vrot.slane %v343, 5
        %v1252 = vsel %vm1189, %v1250, %v1251
        %v1253 = vrot.slane %v344, 5
        %v1254 = vrot.slane %v1253, 4
        %v1255 = vrot.slane %v345, 5
        %v1256 = vsel %vm1189, %v1254, %v1255
        %v1257 = vrot.slane %v1255, 4
        %v1258 = vrot.slane %v346, 5
        %v1259 = vsel %vm1189, %v1257, %v1258
        %v1260 = vrot.slane %v347, 5
        %v1261 = vrot.slane %v1260, 4
        %v1262 = vrot.slane %v348, 5
        %v1263 = vsel %vm1189, %v1261, %v1262
        %v1264 = vrot.slane %v1262, 4
        %v1265 = vrot.slane %v349, 5
        %v1266 = vsel %vm1189, %v1264, %v1265
        %v1267 = vrot.slane %v350, 5
        %v1268 = vrot.slane %v1267, 4
        %v1269 = vrot.slane %v351, 5
        %v1270 = vsel %vm1189, %v1268, %v1269
        %v1271 = vrot.slane %v1269, 4
        %v1272 = vrot.slane %v352, 5
        %v1273 = vsel %vm1189, %v1271, %v1272
        %v1274 = vrot.slane %v353, 5
        %v1275 = vrot.slane %v1274, 4
        %v1276 = vrot.slane %v354, 5
        %v1277 = vsel %vm1189, %v1275, %v1276
        %v1278 = vrot.slane %v1276, 4
        %v1279 = vrot.slane %v355, 5
        %v1280 = vsel %vm1189, %v1278, %v1279
        %v1281 = vrot.slane %v356, 5
        %v1282 = vrot.slane %v1281, 4
        %v1283 = vrot.slane %v357, 5
        %v1284 = vsel %vm1189, %v1282, %v1283
        %v1285 = vrot.slane %v1283, 4
        %v1286 = vrot.slane %v358, 5
        %v1287 = vsel %vm1189, %v1285, %v1286
        %v1288 = vrot.slane %v359, 5
        %v1289 = vrot.slane %v1288, 4
        %v1290 = vrot.slane %v360, 5
        %v1291 = vsel %vm1189, %v1289, %v1290
        %v1292 = vrot.slane %v1290, 4
        %v1293 = vrot.slane %v361, 5
        %v1294 = vsel %vm1189, %v1292, %v1293
        %v1295 = vrot.slane %v362, 5
        %v1296 = vrot.slane %v1295, 4
        %v1297 = vrot.slane %v363, 5
        %v1298 = vsel %vm1189, %v1296, %v1297
        %v1299 = vrot.slane %v1297, 4
        %v1300 = vrot.slane %v364, 5
        %v1301 = vsel %vm1189, %v1299, %v1300
        %s1302 = scalar_lea.vmem %s311, 8
        %v1303 = vld [vmem:[%s1302] sm:$0xf]
        %v1304 = vunpack.c.l.b16 %v1193
        %v1305 = vunpack.c.l.b16 %v1196
        %v1306 = vunpack.c.l.b16 %v1200
        %v1307 = vunpack.c.l.b16 %v1203
        %v1308 = vunpack.c.l.b16 %v1207
        %v1309 = vunpack.c.l.b16 %v1210
        %v1310 = vunpack.c.l.b16 %v1214
        %v1311 = vunpack.c.l.b16 %v1217
        %v1312 = vunpack.c.l.b16 %v1221
        %v1313 = vunpack.c.l.b16 %v1224
        %v1314 = vunpack.c.l.b16 %v1228
        %v1315 = vunpack.c.l.b16 %v1231
        %v1316 = vunpack.c.l.b16 %v1235
        %v1317 = vunpack.c.l.b16 %v1238
        %v1318 = vunpack.c.l.b16 %v1242
        %v1319 = vunpack.c.l.b16 %v1245
        %v1320 = vunpack.c.l.b16 %v1249
        %v1321 = vunpack.c.l.b16 %v1252
        %v1322 = vunpack.c.l.b16 %v1256
        %v1323 = vunpack.c.l.b16 %v1259
        %v1324 = vunpack.c.l.b16 %v1263
        %v1325 = vunpack.c.l.b16 %v1266
        %v1326 = vunpack.c.l.b16 %v1270
        %v1327 = vunpack.c.l.b16 %v1273
        %v1328 = vunpack.c.l.b16 %v1277
        %v1329 = vunpack.c.l.b16 %v1280
        %v1330 = vunpack.c.l.b16 %v1284
        %v1331 = vunpack.c.l.b16 %v1287
        %v1332 = vunpack.c.l.b16 %v1291
        %v1333 = vunpack.c.l.b16 %v1294
        %v1334 = vunpack.c.l.b16 %v1298
        %v1335 = vunpack.c.l.b16 %v1301
        %v1336 = vpack.c.b16 %v1305, %v1304
        %v1337 = vpack.c.b16 %v1307, %v1306
        %v1338 = vpack.c.b16 %v1309, %v1308
        %v1339 = vpack.c.b16 %v1311, %v1310
        %v1340 = vpack.c.b16 %v1313, %v1312
        %v1341 = vpack.c.b16 %v1315, %v1314
        %v1342 = vpack.c.b16 %v1317, %v1316
        %v1343 = vpack.c.b16 %v1319, %v1318
        %v1344 = vpack.c.b16 %v1321, %v1320
        %v1345 = vpack.c.b16 %v1323, %v1322
        %v1346 = vpack.c.b16 %v1325, %v1324
        %v1347 = vpack.c.b16 %v1327, %v1326
        %v1348 = vpack.c.b16 %v1329, %v1328
        %v1349 = vpack.c.b16 %v1331, %v1330
        %v1350 = vpack.c.b16 %v1333, %v1332
        %v1351 = vpack.c.b16 %v1335, %v1334
        %v1353 = vsel %vm809, %v1336, 0
        %v1356 = vsel %vm809, %v1337, 0
        %v1359 = vsel %vm809, %v1338, 0
        %v1362 = vsel %vm809, %v1339, 0
        %v1365 = vsel %vm809, %v1340, 0
        %v1368 = vsel %vm809, %v1341, 0
        %v1371 = vsel %vm809, %v1342, 0
        %v1374 = vsel %vm809, %v1343, 0
        %v1377 = vsel %vm809, %v1344, 0
        %v1380 = vsel %vm809, %v1345, 0
        %v1383 = vsel %vm809, %v1346, 0
        %v1386 = vsel %vm809, %v1347, 0
        %v1389 = vsel %vm809, %v1348, 0
        %v1392 = vsel %vm809, %v1349, 0
        %v1395 = vsel %vm809, %v1350, 0
        %v1398 = vsel %vm809, %v1351, 0
        %v1401 = vsel %vm858, %v1303, 0
        %1403 = vmatpush.bf16.msra.mxu0 0
        %1404 = vmatpush.bf16.msra.mxu0 0
        %1405 = vmatpush.bf16.msra.mxu0 0
        %1406 = vmatpush.bf16.msra.mxu0 0
        %1407 = vmatpush.bf16.msra.mxu0 0
        %1408 = vmatpush.bf16.msra.mxu0 0
        %1409 = vmatpush.bf16.msra.mxu0 0
        %1410 = vmatpush.bf16.msra.mxu0 %v1401
        %1411 = vmatmul.bf16.gmra.mxu0 %v1353
        %v1412 = vpop.f32.mrf.mxu0
        %v1413 = vadd.f32 0.0, %v1412
        %v1414 = vpop.f32.mrf.mxu0
        %v1415 = vadd.f32 0.0, %v1414
        %1416 = vmatmul.bf16.gmra.mxu0 %v1356
        %v1417 = vpop.f32.mrf.mxu0
        %v1418 = vadd.f32 0.0, %v1417
        %v1419 = vpop.f32.mrf.mxu0
        %v1420 = vadd.f32 0.0, %v1419
        %1421 = vmatmul.bf16.gmra.mxu0 %v1359
        %v1422 = vpop.f32.mrf.mxu0
        %v1423 = vadd.f32 0.0, %v1422
        %v1424 = vpop.f32.mrf.mxu0
        %v1425 = vadd.f32 0.0, %v1424
        %1426 = vmatmul.bf16.gmra.mxu0 %v1362
        %v1427 = vpop.f32.mrf.mxu0
        %v1428 = vadd.f32 0.0, %v1427
        %v1429 = vpop.f32.mrf.mxu0
        %v1430 = vadd.f32 0.0, %v1429
        %1431 = vmatmul.bf16.gmra.mxu0 %v1365
        %v1432 = vpop.f32.mrf.mxu0
        %v1433 = vadd.f32 0.0, %v1432
        %v1434 = vpop.f32.mrf.mxu0
        %v1435 = vadd.f32 0.0, %v1434
        %1436 = vmatmul.bf16.gmra.mxu0 %v1368
        %v1437 = vpop.f32.mrf.mxu0
        %v1438 = vadd.f32 0.0, %v1437
        %v1439 = vpop.f32.mrf.mxu0
        %v1440 = vadd.f32 0.0, %v1439
        %1441 = vmatmul.bf16.gmra.mxu0 %v1371
        %v1442 = vpop.f32.mrf.mxu0
        %v1443 = vadd.f32 0.0, %v1442
        %v1444 = vpop.f32.mrf.mxu0
        %v1445 = vadd.f32 0.0, %v1444
        %1446 = vmatmul.bf16.gmra.mxu0 %v1374
        %v1447 = vpop.f32.mrf.mxu0
        %v1448 = vadd.f32 0.0, %v1447
        %v1449 = vpop.f32.mrf.mxu0
        %v1450 = vadd.f32 0.0, %v1449
        %1451 = vmatmul.bf16.gmra.mxu0 %v1377
        %v1452 = vpop.f32.mrf.mxu0
        %v1453 = vadd.f32 0.0, %v1452
        %v1454 = vpop.f32.mrf.mxu0
        %v1455 = vadd.f32 0.0, %v1454
        %1456 = vmatmul.bf16.gmra.mxu0 %v1380
        %v1457 = vpop.f32.mrf.mxu0
        %v1458 = vadd.f32 0.0, %v1457
        %v1459 = vpop.f32.mrf.mxu0
        %v1460 = vadd.f32 0.0, %v1459
        %1461 = vmatmul.bf16.gmra.mxu0 %v1383
        %v1462 = vpop.f32.mrf.mxu0
        %v1463 = vadd.f32 0.0, %v1462
        %v1464 = vpop.f32.mrf.mxu0
        %v1465 = vadd.f32 0.0, %v1464
        %1466 = vmatmul.bf16.gmra.mxu0 %v1386
        %v1467 = vpop.f32.mrf.mxu0
        %v1468 = vadd.f32 0.0, %v1467
        %v1469 = vpop.f32.mrf.mxu0
        %v1470 = vadd.f32 0.0, %v1469
        %1471 = vmatmul.bf16.gmra.mxu0 %v1389
        %v1472 = vpop.f32.mrf.mxu0
        %v1473 = vadd.f32 0.0, %v1472
        %v1474 = vpop.f32.mrf.mxu0
        %v1475 = vadd.f32 0.0, %v1474
        %1476 = vmatmul.bf16.gmra.mxu0 %v1392
        %v1477 = vpop.f32.mrf.mxu0
        %v1478 = vadd.f32 0.0, %v1477
        %v1479 = vpop.f32.mrf.mxu0
        %v1480 = vadd.f32 0.0, %v1479
        %1481 = vmatmul.bf16.gmra.mxu0 %v1395
        %v1482 = vpop.f32.mrf.mxu0
        %v1483 = vadd.f32 0.0, %v1482
        %v1484 = vpop.f32.mrf.mxu0
        %v1485 = vadd.f32 0.0, %v1484
        %1486 = vmatmul.bf16.gmra.mxu0 %v1398
        %v1487 = vpop.f32.mrf.mxu0
        %v1488 = vadd.f32 0.0, %v1487
        %v1489 = vpop.f32.mrf.mxu0
        %v1490 = vadd.f32 0.0, %v1489
        %1491 = vdwg.mxu0
        %v1492 = vadd.f32 %v1092, %v1413
        %v1493 = vadd.f32 %v1094, %v1415
        %v1494 = vadd.f32 %v1097, %v1418
        %v1495 = vadd.f32 %v1099, %v1420
        %v1496 = vadd.f32 %v1102, %v1423
        %v1497 = vadd.f32 %v1104, %v1425
        %v1498 = vadd.f32 %v1107, %v1428
        %v1499 = vadd.f32 %v1109, %v1430
        %v1500 = vadd.f32 %v1112, %v1433
        %v1501 = vadd.f32 %v1114, %v1435
        %v1502 = vadd.f32 %v1117, %v1438
        %v1503 = vadd.f32 %v1119, %v1440
        %v1504 = vadd.f32 %v1122, %v1443
        %v1505 = vadd.f32 %v1124, %v1445
        %v1506 = vadd.f32 %v1127, %v1448
        %v1507 = vadd.f32 %v1129, %v1450
        %v1508 = vadd.f32 %v1132, %v1453
        %v1509 = vadd.f32 %v1134, %v1455
        %v1510 = vadd.f32 %v1137, %v1458
        %v1511 = vadd.f32 %v1139, %v1460
        %v1512 = vadd.f32 %v1142, %v1463
        %v1513 = vadd.f32 %v1144, %v1465
        %v1514 = vadd.f32 %v1147, %v1468
        %v1515 = vadd.f32 %v1149, %v1470
        %v1516 = vadd.f32 %v1152, %v1473
        %v1517 = vadd.f32 %v1154, %v1475
        %v1518 = vadd.f32 %v1157, %v1478
        %v1519 = vadd.f32 %v1159, %v1480
        %v1520 = vadd.f32 %v1162, %v1483
        %v1521 = vadd.f32 %v1164, %v1485
        %v1522 = vadd.f32 %v1167, %v1488
        %v1523 = vadd.f32 %v1169, %v1490
        %s1524 = scalar_lea.vmem %s311, 12
        %v1525 = vld [vmem:[%s1524] sm:$0xf]
        %v1528 = vunpack.c.l.b16 %v365
        %v1529 = vunpack.c.l.b16 %v366
        %v1530 = vpack.c.b16 %v1529, %v1528
        %v1532 = vsel %vm809, %v1530, 0
        %v1535 = vsel %vm858, %v1525, 0
        %1537 = vmatpush.bf16.msra.mxu0 0
        %1538 = vmatpush.bf16.msra.mxu0 0
        %1539 = vmatpush.bf16.msra.mxu0 0
        %1540 = vmatpush.bf16.msra.mxu0 0
        %1541 = vmatpush.bf16.msra.mxu0 0
        %1542 = vmatpush.bf16.msra.mxu0 0
        %1543 = vmatpush.bf16.msra.mxu0 0
        %1544 = vmatpush.bf16.msra.mxu0 %v1535
        %1545 = vmatmul.bf16.gmra.mxu0 %v1035
        %v1546 = vpop.f32.mrf.mxu0
        %v1547 = vadd.f32 0.0, %v1546
        %v1548 = vpop.f32.mrf.mxu0
        %v1549 = vadd.f32 0.0, %v1548
        %1550 = vmatmul.bf16.gmra.mxu0 %v1038
        %v1551 = vpop.f32.mrf.mxu0
        %v1552 = vadd.f32 0.0, %v1551
        %v1553 = vpop.f32.mrf.mxu0
        %v1554 = vadd.f32 0.0, %v1553
        %1555 = vmatmul.bf16.gmra.mxu0 %v1041
        %v1556 = vpop.f32.mrf.mxu0
        %v1557 = vadd.f32 0.0, %v1556
        %v1558 = vpop.f32.mrf.mxu0
        %v1559 = vadd.f32 0.0, %v1558
        %1560 = vmatmul.bf16.gmra.mxu0 %v1044
        %v1561 = vpop.f32.mrf.mxu0
        %v1562 = vadd.f32 0.0, %v1561
        %v1563 = vpop.f32.mrf.mxu0
        %v1564 = vadd.f32 0.0, %v1563
        %1565 = vmatmul.bf16.gmra.mxu0 %v1047
        %v1566 = vpop.f32.mrf.mxu0
        %v1567 = vadd.f32 0.0, %v1566
        %v1568 = vpop.f32.mrf.mxu0
        %v1569 = vadd.f32 0.0, %v1568
        %1570 = vmatmul.bf16.gmra.mxu0 %v1050
        %v1571 = vpop.f32.mrf.mxu0
        %v1572 = vadd.f32 0.0, %v1571
        %v1573 = vpop.f32.mrf.mxu0
        %v1574 = vadd.f32 0.0, %v1573
        %1575 = vmatmul.bf16.gmra.mxu0 %v1053
        %v1576 = vpop.f32.mrf.mxu0
        %v1577 = vadd.f32 0.0, %v1576
        %v1578 = vpop.f32.mrf.mxu0
        %v1579 = vadd.f32 0.0, %v1578
        %1580 = vmatmul.bf16.gmra.mxu0 %v1056
        %v1581 = vpop.f32.mrf.mxu0
        %v1582 = vadd.f32 0.0, %v1581
        %v1583 = vpop.f32.mrf.mxu0
        %v1584 = vadd.f32 0.0, %v1583
        %1585 = vmatmul.bf16.gmra.mxu0 %v1059
        %v1586 = vpop.f32.mrf.mxu0
        %v1587 = vadd.f32 0.0, %v1586
        %v1588 = vpop.f32.mrf.mxu0
        %v1589 = vadd.f32 0.0, %v1588
        %1590 = vmatmul.bf16.gmra.mxu0 %v1062
        %v1591 = vpop.f32.mrf.mxu0
        %v1592 = vadd.f32 0.0, %v1591
        %v1593 = vpop.f32.mrf.mxu0
        %v1594 = vadd.f32 0.0, %v1593
        %1595 = vmatmul.bf16.gmra.mxu0 %v1065
        %v1596 = vpop.f32.mrf.mxu0
        %v1597 = vadd.f32 0.0, %v1596
        %v1598 = vpop.f32.mrf.mxu0
        %v1599 = vadd.f32 0.0, %v1598
        %1600 = vmatmul.bf16.gmra.mxu0 %v1068
        %v1601 = vpop.f32.mrf.mxu0
        %v1602 = vadd.f32 0.0, %v1601
        %v1603 = vpop.f32.mrf.mxu0
        %v1604 = vadd.f32 0.0, %v1603
        %1605 = vmatmul.bf16.gmra.mxu0 %v1071
        %v1606 = vpop.f32.mrf.mxu0
        %v1607 = vadd.f32 0.0, %v1606
        %v1608 = vpop.f32.mrf.mxu0
        %v1609 = vadd.f32 0.0, %v1608
        %1610 = vmatmul.bf16.gmra.mxu0 %v1074
        %v1611 = vpop.f32.mrf.mxu0
        %v1612 = vadd.f32 0.0, %v1611
        %v1613 = vpop.f32.mrf.mxu0
        %v1614 = vadd.f32 0.0, %v1613
        %1615 = vmatmul.bf16.gmra.mxu0 %v1077
        %v1616 = vpop.f32.mrf.mxu0
        %v1617 = vadd.f32 0.0, %v1616
        %v1618 = vpop.f32.mrf.mxu0
        %v1619 = vadd.f32 0.0, %v1618
        %1620 = vmatmul.bf16.gmra.mxu0 %v1532
        %v1621 = vpop.f32.mrf.mxu0
        %v1622 = vadd.f32 0.0, %v1621
        %v1623 = vpop.f32.mrf.mxu0
        %v1624 = vadd.f32 0.0, %v1623
        %1625 = vdwg.mxu0
        %v1626 = vadd.f32 %v1492, %v1547
        %v1627 = vadd.f32 %v1493, %v1549
        %v1628 = vadd.f32 %v1494, %v1552
        %v1629 = vadd.f32 %v1495, %v1554
        %v1630 = vadd.f32 %v1496, %v1557
        %v1631 = vadd.f32 %v1497, %v1559
        %v1632 = vadd.f32 %v1498, %v1562
        %v1633 = vadd.f32 %v1499, %v1564
        %v1634 = vadd.f32 %v1500, %v1567
        %v1635 = vadd.f32 %v1501, %v1569
        %v1636 = vadd.f32 %v1502, %v1572
        %v1637 = vadd.f32 %v1503, %v1574
        %v1638 = vadd.f32 %v1504, %v1577
        %v1639 = vadd.f32 %v1505, %v1579
        %v1640 = vadd.f32 %v1506, %v1582
        %v1641 = vadd.f32 %v1507, %v1584
        %v1642 = vadd.f32 %v1508, %v1587
        %v1643 = vadd.f32 %v1509, %v1589
        %v1644 = vadd.f32 %v1510, %v1592
        %v1645 = vadd.f32 %v1511, %v1594
        %v1646 = vadd.f32 %v1512, %v1597
        %v1647 = vadd.f32 %v1513, %v1599
        %v1648 = vadd.f32 %v1514, %v1602
        %v1649 = vadd.f32 %v1515, %v1604
        %v1650 = vadd.f32 %v1516, %v1607
        %v1651 = vadd.f32 %v1517, %v1609
        %v1652 = vadd.f32 %v1518, %v1612
        %v1653 = vadd.f32 %v1519, %v1614
        %v1654 = vadd.f32 %v1520, %v1617
        %v1655 = vadd.f32 %v1521, %v1619
        %v1656 = vadd.f32 %v1522, %v1622
        %v1657 = vadd.f32 %v1523, %v1624
        %v1659 = vshrl.u32 %v365, 16
        %v1661 = vrot.slane %v1659, 4
        %v1662 = vshll.u32 %v365, 16
        %v1664 = vrot.slane %v1662, 5
        %v1665 = vor.u32 %v1661, %v1664
        %v1666 = vrot.slane %v1665, 4
        %v1668 = vshll.u32 %v366, 16
        %v1670 = vrot.slane %v1668, 5
        %v1671 = vsel %vm374, %v1666, %v1670
        %v1672 = vshrl.u32 %v366, 16
        %v1674 = vrot.slane %v1672, 4
        %v1675 = vor.u32 %v1674, %v1670
        %v1676 = vrot.slane %v1675, 4
        %v1678 = vshll.u32 %v367, 16
        %v1680 = vrot.slane %v1678, 5
        %v1681 = vsel %vm374, %v1676, %v1680
        %s1682 = scalar_lea.vmem %s311, 16
        %v1683 = vld [vmem:[%s1682] sm:$0xf]
        %v1684 = vunpack.c.l.b16 %v1671
        %v1685 = vunpack.c.l.b16 %v1681
        %v1686 = vpack.c.b16 %v1685, %v1684
        %v1688 = vsel %vm809, %v1686, 0
        %v1691 = vsel %vm858, %v1683, 0
        %1693 = vmatpush.bf16.msra.mxu0 0
        %1694 = vmatpush.bf16.msra.mxu0 0
        %1695 = vmatpush.bf16.msra.mxu0 0
        %1696 = vmatpush.bf16.msra.mxu0 0
        %1697 = vmatpush.bf16.msra.mxu0 0
        %1698 = vmatpush.bf16.msra.mxu0 0
        %1699 = vmatpush.bf16.msra.mxu0 0
        %1700 = vmatpush.bf16.msra.mxu0 %v1691
        %1701 = vmatmul.bf16.gmra.mxu0 %v814
        %v1702 = vpop.f32.mrf.mxu0
        %v1703 = vadd.f32 0.0, %v1702
        %v1704 = vpop.f32.mrf.mxu0
        %v1705 = vadd.f32 0.0, %v1704
        %1706 = vmatmul.bf16.gmra.mxu0 %v817
        %v1707 = vpop.f32.mrf.mxu0
        %v1708 = vadd.f32 0.0, %v1707
        %v1709 = vpop.f32.mrf.mxu0
        %v1710 = vadd.f32 0.0, %v1709
        %1711 = vmatmul.bf16.gmra.mxu0 %v820
        %v1712 = vpop.f32.mrf.mxu0
        %v1713 = vadd.f32 0.0, %v1712
        %v1714 = vpop.f32.mrf.mxu0
        %v1715 = vadd.f32 0.0, %v1714
        %1716 = vmatmul.bf16.gmra.mxu0 %v823
        %v1717 = vpop.f32.mrf.mxu0
        %v1718 = vadd.f32 0.0, %v1717
        %v1719 = vpop.f32.mrf.mxu0
        %v1720 = vadd.f32 0.0, %v1719
        %1721 = vmatmul.bf16.gmra.mxu0 %v826
        %v1722 = vpop.f32.mrf.mxu0
        %v1723 = vadd.f32 0.0, %v1722
        %v1724 = vpop.f32.mrf.mxu0
        %v1725 = vadd.f32 0.0, %v1724
        %1726 = vmatmul.bf16.gmra.mxu0 %v829
        %v1727 = vpop.f32.mrf.mxu0
        %v1728 = vadd.f32 0.0, %v1727
        %v1729 = vpop.f32.mrf.mxu0
        %v1730 = vadd.f32 0.0, %v1729
        %1731 = vmatmul.bf16.gmra.mxu0 %v832
        %v1732 = vpop.f32.mrf.mxu0
        %v1733 = vadd.f32 0.0, %v1732
        %v1734 = vpop.f32.mrf.mxu0
        %v1735 = vadd.f32 0.0, %v1734
        %1736 = vmatmul.bf16.gmra.mxu0 %v835
        %v1737 = vpop.f32.mrf.mxu0
        %v1738 = vadd.f32 0.0, %v1737
        %v1739 = vpop.f32.mrf.mxu0
        %v1740 = vadd.f32 0.0, %v1739
        %1741 = vmatmul.bf16.gmra.mxu0 %v838
        %v1742 = vpop.f32.mrf.mxu0
        %v1743 = vadd.f32 0.0, %v1742
        %v1744 = vpop.f32.mrf.mxu0
        %v1745 = vadd.f32 0.0, %v1744
        %1746 = vmatmul.bf16.gmra.mxu0 %v841
        %v1747 = vpop.f32.mrf.mxu0
        %v1748 = vadd.f32 0.0, %v1747
        %v1749 = vpop.f32.mrf.mxu0
        %v1750 = vadd.f32 0.0, %v1749
        %1751 = vmatmul.bf16.gmra.mxu0 %v844
        %v1752 = vpop.f32.mrf.mxu0
        %v1753 = vadd.f32 0.0, %v1752
        %v1754 = vpop.f32.mrf.mxu0
        %v1755 = vadd.f32 0.0, %v1754
        %1756 = vmatmul.bf16.gmra.mxu0 %v847
        %v1757 = vpop.f32.mrf.mxu0
        %v1758 = vadd.f32 0.0, %v1757
        %v1759 = vpop.f32.mrf.mxu0
        %v1760 = vadd.f32 0.0, %v1759
        %1761 = vmatmul.bf16.gmra.mxu0 %v850
        %v1762 = vpop.f32.mrf.mxu0
        %v1763 = vadd.f32 0.0, %v1762
        %v1764 = vpop.f32.mrf.mxu0
        %v1765 = vadd.f32 0.0, %v1764
        %1766 = vmatmul.bf16.gmra.mxu0 %v853
        %v1767 = vpop.f32.mrf.mxu0
        %v1768 = vadd.f32 0.0, %v1767
        %v1769 = vpop.f32.mrf.mxu0
        %v1770 = vadd.f32 0.0, %v1769
        %1771 = vmatmul.bf16.gmra.mxu0 %v856
        %v1772 = vpop.f32.mrf.mxu0
        %v1773 = vadd.f32 0.0, %v1772
        %v1774 = vpop.f32.mrf.mxu0
        %v1775 = vadd.f32 0.0, %v1774
        %1776 = vmatmul.bf16.gmra.mxu0 %v1688
        %v1777 = vpop.f32.mrf.mxu0
        %v1778 = vadd.f32 0.0, %v1777
        %v1779 = vpop.f32.mrf.mxu0
        %v1780 = vadd.f32 0.0, %v1779
        %1781 = vdwg.mxu0
        %v1782 = vadd.f32 %v1626, %v1703
        %v1783 = vadd.f32 %v1627, %v1705
        %v1784 = vadd.f32 %v1628, %v1708
        %v1785 = vadd.f32 %v1629, %v1710
        %v1786 = vadd.f32 %v1630, %v1713
        %v1787 = vadd.f32 %v1631, %v1715
        %v1788 = vadd.f32 %v1632, %v1718
        %v1789 = vadd.f32 %v1633, %v1720
        %v1790 = vadd.f32 %v1634, %v1723
        %v1791 = vadd.f32 %v1635, %v1725
        %v1792 = vadd.f32 %v1636, %v1728
        %v1793 = vadd.f32 %v1637, %v1730
        %v1794 = vadd.f32 %v1638, %v1733
        %v1795 = vadd.f32 %v1639, %v1735
        %v1796 = vadd.f32 %v1640, %v1738
        %v1797 = vadd.f32 %v1641, %v1740
        %v1798 = vadd.f32 %v1642, %v1743
        %v1799 = vadd.f32 %v1643, %v1745
        %v1800 = vadd.f32 %v1644, %v1748
        %v1801 = vadd.f32 %v1645, %v1750
        %v1802 = vadd.f32 %v1646, %v1753
        %v1803 = vadd.f32 %v1647, %v1755
        %v1804 = vadd.f32 %v1648, %v1758
        %v1805 = vadd.f32 %v1649, %v1760
        %v1806 = vadd.f32 %v1650, %v1763
        %v1807 = vadd.f32 %v1651, %v1765
        %v1808 = vadd.f32 %v1652, %v1768
        %v1809 = vadd.f32 %v1653, %v1770
        %v1810 = vadd.f32 %v1654, %v1773
        %v1811 = vadd.f32 %v1655, %v1775
        %v1812 = vadd.f32 %v1656, %v1778
        %v1813 = vadd.f32 %v1657, %v1780
        %v1815 = vrot.slane %v365, 5
        %v1816 = vrot.slane %v1815, 4
        %v1817 = vrot.slane %v366, 5
        %v1818 = vsel %vm1189, %v1816, %v1817
        %v1819 = vrot.slane %v1817, 4
        %v1820 = vrot.slane %v367, 5
        %v1821 = vsel %vm1189, %v1819, %v1820
        %s1822 = scalar_lea.vmem %s311, 20
        %v1823 = vld [vmem:[%s1822] sm:$0xf]
        %v1824 = vunpack.c.l.b16 %v1818
        %v1825 = vunpack.c.l.b16 %v1821
        %v1826 = vpack.c.b16 %v1825, %v1824
        %v1828 = vsel %vm809, %v1826, 0
        %v1831 = vsel %vm858, %v1823, 0
        %1833 = vmatpush.bf16.msra.mxu0 0
        %1834 = vmatpush.bf16.msra.mxu0 0
        %1835 = vmatpush.bf16.msra.mxu0 0
        %1836 = vmatpush.bf16.msra.mxu0 0
        %1837 = vmatpush.bf16.msra.mxu0 0
        %1838 = vmatpush.bf16.msra.mxu0 0
        %1839 = vmatpush.bf16.msra.mxu0 0
        %1840 = vmatpush.bf16.msra.mxu0 %v1831
        %1841 = vmatmul.bf16.gmra.mxu0 %v1356
        %v1842 = vpop.f32.mrf.mxu0
        %v1843 = vadd.f32 0.0, %v1842
        %v1844 = vpop.f32.mrf.mxu0
        %v1845 = vadd.f32 0.0, %v1844
        %1846 = vmatmul.bf16.gmra.mxu0 %v1359
        %v1847 = vpop.f32.mrf.mxu0
        %v1848 = vadd.f32 0.0, %v1847
        %v1849 = vpop.f32.mrf.mxu0
        %v1850 = vadd.f32 0.0, %v1849
        %1851 = vmatmul.bf16.gmra.mxu0 %v1362
        %v1852 = vpop.f32.mrf.mxu0
        %v1853 = vadd.f32 0.0, %v1852
        %v1854 = vpop.f32.mrf.mxu0
        %v1855 = vadd.f32 0.0, %v1854
        %1856 = vmatmul.bf16.gmra.mxu0 %v1365
        %v1857 = vpop.f32.mrf.mxu0
        %v1858 = vadd.f32 0.0, %v1857
        %v1859 = vpop.f32.mrf.mxu0
        %v1860 = vadd.f32 0.0, %v1859
        %1861 = vmatmul.bf16.gmra.mxu0 %v1368
        %v1862 = vpop.f32.mrf.mxu0
        %v1863 = vadd.f32 0.0, %v1862
        %v1864 = vpop.f32.mrf.mxu0
        %v1865 = vadd.f32 0.0, %v1864
        %1866 = vmatmul.bf16.gmra.mxu0 %v1371
        %v1867 = vpop.f32.mrf.mxu0
        %v1868 = vadd.f32 0.0, %v1867
        %v1869 = vpop.f32.mrf.mxu0
        %v1870 = vadd.f32 0.0, %v1869
        %1871 = vmatmul.bf16.gmra.mxu0 %v1374
        %v1872 = vpop.f32.mrf.mxu0
        %v1873 = vadd.f32 0.0, %v1872
        %v1874 = vpop.f32.mrf.mxu0
        %v1875 = vadd.f32 0.0, %v1874
        %1876 = vmatmul.bf16.gmra.mxu0 %v1377
        %v1877 = vpop.f32.mrf.mxu0
        %v1878 = vadd.f32 0.0, %v1877
        %v1879 = vpop.f32.mrf.mxu0
        %v1880 = vadd.f32 0.0, %v1879
        %1881 = vmatmul.bf16.gmra.mxu0 %v1380
        %v1882 = vpop.f32.mrf.mxu0
        %v1883 = vadd.f32 0.0, %v1882
        %v1884 = vpop.f32.mrf.mxu0
        %v1885 = vadd.f32 0.0, %v1884
        %1886 = vmatmul.bf16.gmra.mxu0 %v1383
        %v1887 = vpop.f32.mrf.mxu0
        %v1888 = vadd.f32 0.0, %v1887
        %v1889 = vpop.f32.mrf.mxu0
        %v1890 = vadd.f32 0.0, %v1889
        %1891 = vmatmul.bf16.gmra.mxu0 %v1386
        %v1892 = vpop.f32.mrf.mxu0
        %v1893 = vadd.f32 0.0, %v1892
        %v1894 = vpop.f32.mrf.mxu0
        %v1895 = vadd.f32 0.0, %v1894
        %1896 = vmatmul.bf16.gmra.mxu0 %v1389
        %v1897 = vpop.f32.mrf.mxu0
        %v1898 = vadd.f32 0.0, %v1897
        %v1899 = vpop.f32.mrf.mxu0
        %v1900 = vadd.f32 0.0, %v1899
        %1901 = vmatmul.bf16.gmra.mxu0 %v1392
        %v1902 = vpop.f32.mrf.mxu0
        %v1903 = vadd.f32 0.0, %v1902
        %v1904 = vpop.f32.mrf.mxu0
        %v1905 = vadd.f32 0.0, %v1904
        %1906 = vmatmul.bf16.gmra.mxu0 %v1395
        %v1907 = vpop.f32.mrf.mxu0
        %v1908 = vadd.f32 0.0, %v1907
        %v1909 = vpop.f32.mrf.mxu0
        %v1910 = vadd.f32 0.0, %v1909
        %1911 = vmatmul.bf16.gmra.mxu0 %v1398
        %v1912 = vpop.f32.mrf.mxu0
        %v1913 = vadd.f32 0.0, %v1912
        %v1914 = vpop.f32.mrf.mxu0
        %v1915 = vadd.f32 0.0, %v1914
        %1916 = vmatmul.bf16.gmra.mxu0 %v1828
        %v1917 = vpop.f32.mrf.mxu0
        %v1918 = vadd.f32 0.0, %v1917
        %v1919 = vpop.f32.mrf.mxu0
        %v1920 = vadd.f32 0.0, %v1919
        %1921 = vdwg.mxu0
        %v1922 = vadd.f32 %v1782, %v1843
        %v1923 = vadd.f32 %v1783, %v1845
        %v1924 = vadd.f32 %v1784, %v1848
        %v1925 = vadd.f32 %v1785, %v1850
        %v1926 = vadd.f32 %v1786, %v1853
        %v1927 = vadd.f32 %v1787, %v1855
        %v1928 = vadd.f32 %v1788, %v1858
        %v1929 = vadd.f32 %v1789, %v1860
        %v1930 = vadd.f32 %v1790, %v1863
        %v1931 = vadd.f32 %v1791, %v1865
        %v1932 = vadd.f32 %v1792, %v1868
        %v1933 = vadd.f32 %v1793, %v1870
        %v1934 = vadd.f32 %v1794, %v1873
        %v1935 = vadd.f32 %v1795, %v1875
        %v1936 = vadd.f32 %v1796, %v1878
        %v1937 = vadd.f32 %v1797, %v1880
        %v1938 = vadd.f32 %v1798, %v1883
        %v1939 = vadd.f32 %v1799, %v1885
        %v1940 = vadd.f32 %v1800, %v1888
        %v1941 = vadd.f32 %v1801, %v1890
        %v1942 = vadd.f32 %v1802, %v1893
        %v1943 = vadd.f32 %v1803, %v1895
        %v1944 = vadd.f32 %v1804, %v1898
        %v1945 = vadd.f32 %v1805, %v1900
        %v1946 = vadd.f32 %v1806, %v1903
        %v1947 = vadd.f32 %v1807, %v1905
        %v1948 = vadd.f32 %v1808, %v1908
        %v1949 = vadd.f32 %v1809, %v1910
        %v1950 = vadd.f32 %v1810, %v1913
        %v1951 = vadd.f32 %v1811, %v1915
        %v1952 = vadd.f32 %v1812, %v1918
        %v1953 = vadd.f32 %v1813, %v1920
        %s1954 = scalar_lea.vmem %s311, 24
        %v1955 = vld [vmem:[%s1954] sm:$0xf]
        %v1958 = vunpack.c.l.b16 %v368
        %v1959 = vunpack.c.l.b16 %v369
        %v1960 = vpack.c.b16 %v1959, %v1958
        %v1962 = vsel %vm809, %v1960, 0
        %v1965 = vsel %vm858, %v1955, 0
        %1967 = vmatpush.bf16.msra.mxu0 0
        %1968 = vmatpush.bf16.msra.mxu0 0
        %1969 = vmatpush.bf16.msra.mxu0 0
        %1970 = vmatpush.bf16.msra.mxu0 0
        %1971 = vmatpush.bf16.msra.mxu0 0
        %1972 = vmatpush.bf16.msra.mxu0 0
        %1973 = vmatpush.bf16.msra.mxu0 0
        %1974 = vmatpush.bf16.msra.mxu0 %v1965
        %1975 = vmatmul.bf16.gmra.mxu0 %v1038
        %v1976 = vpop.f32.mrf.mxu0
        %v1977 = vadd.f32 0.0, %v1976
        %v1978 = vpop.f32.mrf.mxu0
        %v1979 = vadd.f32 0.0, %v1978
        %1980 = vmatmul.bf16.gmra.mxu0 %v1041
        %v1981 = vpop.f32.mrf.mxu0
        %v1982 = vadd.f32 0.0, %v1981
        %v1983 = vpop.f32.mrf.mxu0
        %v1984 = vadd.f32 0.0, %v1983
        %1985 = vmatmul.bf16.gmra.mxu0 %v1044
        %v1986 = vpop.f32.mrf.mxu0
        %v1987 = vadd.f32 0.0, %v1986
        %v1988 = vpop.f32.mrf.mxu0
        %v1989 = vadd.f32 0.0, %v1988
        %1990 = vmatmul.bf16.gmra.mxu0 %v1047
        %v1991 = vpop.f32.mrf.mxu0
        %v1992 = vadd.f32 0.0, %v1991
        %v1993 = vpop.f32.mrf.mxu0
        %v1994 = vadd.f32 0.0, %v1993
        %1995 = vmatmul.bf16.gmra.mxu0 %v1050
        %v1996 = vpop.f32.mrf.mxu0
        %v1997 = vadd.f32 0.0, %v1996
        %v1998 = vpop.f32.mrf.mxu0
        %v1999 = vadd.f32 0.0, %v1998
        %2000 = vmatmul.bf16.gmra.mxu0 %v1053
        %v2001 = vpop.f32.mrf.mxu0
        %v2002 = vadd.f32 0.0, %v2001
        %v2003 = vpop.f32.mrf.mxu0
        %v2004 = vadd.f32 0.0, %v2003
        %2005 = vmatmul.bf16.gmra.mxu0 %v1056
        %v2006 = vpop.f32.mrf.mxu0
        %v2007 = vadd.f32 0.0, %v2006
        %v2008 = vpop.f32.mrf.mxu0
        %v2009 = vadd.f32 0.0, %v2008
        %2010 = vmatmul.bf16.gmra.mxu0 %v1059
        %v2011 = vpop.f32.mrf.mxu0
        %v2012 = vadd.f32 0.0, %v2011
        %v2013 = vpop.f32.mrf.mxu0
        %v2014 = vadd.f32 0.0, %v2013
        %2015 = vmatmul.bf16.gmra.mxu0 %v1062
        %v2016 = vpop.f32.mrf.mxu0
        %v2017 = vadd.f32 0.0, %v2016
        %v2018 = vpop.f32.mrf.mxu0
        %v2019 = vadd.f32 0.0, %v2018
        %2020 = vmatmul.bf16.gmra.mxu0 %v1065
        %v2021 = vpop.f32.mrf.mxu0
        %v2022 = vadd.f32 0.0, %v2021
        %v2023 = vpop.f32.mrf.mxu0
        %v2024 = vadd.f32 0.0, %v2023
        %2025 = vmatmul.bf16.gmra.mxu0 %v1068
        %v2026 = vpop.f32.mrf.mxu0
        %v2027 = vadd.f32 0.0, %v2026
        %v2028 = vpop.f32.mrf.mxu0
        %v2029 = vadd.f32 0.0, %v2028
        %2030 = vmatmul.bf16.gmra.mxu0 %v1071
        %v2031 = vpop.f32.mrf.mxu0
        %v2032 = vadd.f32 0.0, %v2031
        %v2033 = vpop.f32.mrf.mxu0
        %v2034 = vadd.f32 0.0, %v2033
        %2035 = vmatmul.bf16.gmra.mxu0 %v1074
        %v2036 = vpop.f32.mrf.mxu0
        %v2037 = vadd.f32 0.0, %v2036
        %v2038 = vpop.f32.mrf.mxu0
        %v2039 = vadd.f32 0.0, %v2038
        %2040 = vmatmul.bf16.gmra.mxu0 %v1077
        %v2041 = vpop.f32.mrf.mxu0
        %v2042 = vadd.f32 0.0, %v2041
        %v2043 = vpop.f32.mrf.mxu0
        %v2044 = vadd.f32 0.0, %v2043
        %2045 = vmatmul.bf16.gmra.mxu0 %v1532
        %v2046 = vpop.f32.mrf.mxu0
        %v2047 = vadd.f32 0.0, %v2046
        %v2048 = vpop.f32.mrf.mxu0
        %v2049 = vadd.f32 0.0, %v2048
        %2050 = vmatmul.bf16.gmra.mxu0 %v1962
        %v2051 = vpop.f32.mrf.mxu0
        %v2052 = vadd.f32 0.0, %v2051
        %v2053 = vpop.f32.mrf.mxu0
        %v2054 = vadd.f32 0.0, %v2053
        %2055 = vdwg.mxu0
        %v2056 = vadd.f32 %v1922, %v1977
        %v2057 = vadd.f32 %v1923, %v1979
        %v2058 = vadd.f32 %v1924, %v1982
        %v2059 = vadd.f32 %v1925, %v1984
        %v2060 = vadd.f32 %v1926, %v1987
        %v2061 = vadd.f32 %v1927, %v1989
        %v2062 = vadd.f32 %v1928, %v1992
        %v2063 = vadd.f32 %v1929, %v1994
        %v2064 = vadd.f32 %v1930, %v1997
        %v2065 = vadd.f32 %v1931, %v1999
        %v2066 = vadd.f32 %v1932, %v2002
        %v2067 = vadd.f32 %v1933, %v2004
        %v2068 = vadd.f32 %v1934, %v2007
        %v2069 = vadd.f32 %v1935, %v2009
        %v2070 = vadd.f32 %v1936, %v2012
        %v2071 = vadd.f32 %v1937, %v2014
        %v2072 = vadd.f32 %v1938, %v2017
        %v2073 = vadd.f32 %v1939, %v2019
        %v2074 = vadd.f32 %v1940, %v2022
        %v2075 = vadd.f32 %v1941, %v2024
        %v2076 = vadd.f32 %v1942, %v2027
        %v2077 = vadd.f32 %v1943, %v2029
        %v2078 = vadd.f32 %v1944, %v2032
        %v2079 = vadd.f32 %v1945, %v2034
        %v2080 = vadd.f32 %v1946, %v2037
        %v2081 = vadd.f32 %v1947, %v2039
        %v2082 = vadd.f32 %v1948, %v2042
        %v2083 = vadd.f32 %v1949, %v2044
        %v2084 = vadd.f32 %v1950, %v2047
        %v2085 = vadd.f32 %v1951, %v2049
        %v2086 = vadd.f32 %v1952, %v2052
        %v2087 = vadd.f32 %v1953, %v2054
        %v2089 = vshrl.u32 %v368, 16
        %v2091 = vrot.slane %v2089, 4
        %v2092 = vshll.u32 %v368, 16
        %v2094 = vrot.slane %v2092, 5
        %v2095 = vor.u32 %v2091, %v2094
        %v2096 = vrot.slane %v2095, 4
        %v2098 = vshll.u32 %v369, 16
        %v2100 = vrot.slane %v2098, 5
        %v2101 = vsel %vm374, %v2096, %v2100
        %v2102 = vshrl.u32 %v369, 16
        %v2104 = vrot.slane %v2102, 4
        %v2105 = vor.u32 %v2104, %v2100
        %v2106 = vrot.slane %v2105, 4
        %v2108 = vshll.u32 %v370, 16
        %v2110 = vrot.slane %v2108, 5
        %v2111 = vsel %vm374, %v2106, %v2110
        %s2112 = scalar_lea.vmem %s311, 28
        %v2113 = vld [vmem:[%s2112] sm:$0xf]
        %v2114 = vunpack.c.l.b16 %v2101
        %v2115 = vunpack.c.l.b16 %v2111
        %v2116 = vpack.c.b16 %v2115, %v2114
        %v2118 = vsel %vm809, %v2116, 0
        %v2121 = vsel %vm858, %v2113, 0
        %2123 = vmatpush.bf16.msra.mxu0 0
        %2124 = vmatpush.bf16.msra.mxu0 0
        %2125 = vmatpush.bf16.msra.mxu0 0
        %2126 = vmatpush.bf16.msra.mxu0 0
        %2127 = vmatpush.bf16.msra.mxu0 0
        %2128 = vmatpush.bf16.msra.mxu0 0
        %2129 = vmatpush.bf16.msra.mxu0 0
        %2130 = vmatpush.bf16.msra.mxu0 %v2121
        %2131 = vmatmul.bf16.gmra.mxu0 %v817
        %v2132 = vpop.f32.mrf.mxu0
        %v2133 = vadd.f32 0.0, %v2132
        %v2134 = vpop.f32.mrf.mxu0
        %v2135 = vadd.f32 0.0, %v2134
        %2136 = vmatmul.bf16.gmra.mxu0 %v820
        %v2137 = vpop.f32.mrf.mxu0
        %v2138 = vadd.f32 0.0, %v2137
        %v2139 = vpop.f32.mrf.mxu0
        %v2140 = vadd.f32 0.0, %v2139
        %2141 = vmatmul.bf16.gmra.mxu0 %v823
        %v2142 = vpop.f32.mrf.mxu0
        %v2143 = vadd.f32 0.0, %v2142
        %v2144 = vpop.f32.mrf.mxu0
        %v2145 = vadd.f32 0.0, %v2144
        %2146 = vmatmul.bf16.gmra.mxu0 %v826
        %v2147 = vpop.f32.mrf.mxu0
        %v2148 = vadd.f32 0.0, %v2147
        %v2149 = vpop.f32.mrf.mxu0
        %v2150 = vadd.f32 0.0, %v2149
        %2151 = vmatmul.bf16.gmra.mxu0 %v829
        %v2152 = vpop.f32.mrf.mxu0
        %v2153 = vadd.f32 0.0, %v2152
        %v2154 = vpop.f32.mrf.mxu0
        %v2155 = vadd.f32 0.0, %v2154
        %2156 = vmatmul.bf16.gmra.mxu0 %v832
        %v2157 = vpop.f32.mrf.mxu0
        %v2158 = vadd.f32 0.0, %v2157
        %v2159 = vpop.f32.mrf.mxu0
        %v2160 = vadd.f32 0.0, %v2159
        %2161 = vmatmul.bf16.gmra.mxu0 %v835
        %v2162 = vpop.f32.mrf.mxu0
        %v2163 = vadd.f32 0.0, %v2162
        %v2164 = vpop.f32.mrf.mxu0
        %v2165 = vadd.f32 0.0, %v2164
        %2166 = vmatmul.bf16.gmra.mxu0 %v838
        %v2167 = vpop.f32.mrf.mxu0
        %v2168 = vadd.f32 0.0, %v2167
        %v2169 = vpop.f32.mrf.mxu0
        %v2170 = vadd.f32 0.0, %v2169
        %2171 = vmatmul.bf16.gmra.mxu0 %v841
        %v2172 = vpop.f32.mrf.mxu0
        %v2173 = vadd.f32 0.0, %v2172
        %v2174 = vpop.f32.mrf.mxu0
        %v2175 = vadd.f32 0.0, %v2174
        %2176 = vmatmul.bf16.gmra.mxu0 %v844
        %v2177 = vpop.f32.mrf.mxu0
        %v2178 = vadd.f32 0.0, %v2177
        %v2179 = vpop.f32.mrf.mxu0
        %v2180 = vadd.f32 0.0, %v2179
        %2181 = vmatmul.bf16.gmra.mxu0 %v847
        %v2182 = vpop.f32.mrf.mxu0
        %v2183 = vadd.f32 0.0, %v2182
        %v2184 = vpop.f32.mrf.mxu0
        %v2185 = vadd.f32 0.0, %v2184
        %2186 = vmatmul.bf16.gmra.mxu0 %v850
        %v2187 = vpop.f32.mrf.mxu0
        %v2188 = vadd.f32 0.0, %v2187
        %v2189 = vpop.f32.mrf.mxu0
        %v2190 = vadd.f32 0.0, %v2189
        %2191 = vmatmul.bf16.gmra.mxu0 %v853
        %v2192 = vpop.f32.mrf.mxu0
        %v2193 = vadd.f32 0.0, %v2192
        %v2194 = vpop.f32.mrf.mxu0
        %v2195 = vadd.f32 0.0, %v2194
        %2196 = vmatmul.bf16.gmra.mxu0 %v856
        %v2197 = vpop.f32.mrf.mxu0
        %v2198 = vadd.f32 0.0, %v2197
        %v2199 = vpop.f32.mrf.mxu0
        %v2200 = vadd.f32 0.0, %v2199
        %2201 = vmatmul.bf16.gmra.mxu0 %v1688
        %v2202 = vpop.f32.mrf.mxu0
        %v2203 = vadd.f32 0.0, %v2202
        %v2204 = vpop.f32.mrf.mxu0
        %v2205 = vadd.f32 0.0, %v2204
        %2206 = vmatmul.bf16.gmra.mxu0 %v2118
        %v2207 = vpop.f32.mrf.mxu0
        %v2208 = vadd.f32 0.0, %v2207
        %v2209 = vpop.f32.mrf.mxu0
        %v2210 = vadd.f32 0.0, %v2209
        %2211 = vdwg.mxu0
        %v2212 = vadd.f32 %v2056, %v2133
        %v2213 = vadd.f32 %v2057, %v2135
        %v2214 = vadd.f32 %v2058, %v2138
        %v2215 = vadd.f32 %v2059, %v2140
        %v2216 = vadd.f32 %v2060, %v2143
        %v2217 = vadd.f32 %v2061, %v2145
        %v2218 = vadd.f32 %v2062, %v2148
        %v2219 = vadd.f32 %v2063, %v2150
        %v2220 = vadd.f32 %v2064, %v2153
        %v2221 = vadd.f32 %v2065, %v2155
        %v2222 = vadd.f32 %v2066, %v2158
        %v2223 = vadd.f32 %v2067, %v2160
        %v2224 = vadd.f32 %v2068, %v2163
        %v2225 = vadd.f32 %v2069, %v2165
        %v2226 = vadd.f32 %v2070, %v2168
        %v2227 = vadd.f32 %v2071, %v2170
        %v2228 = vadd.f32 %v2072, %v2173
        %v2229 = vadd.f32 %v2073, %v2175
        %v2230 = vadd.f32 %v2074, %v2178
        %v2231 = vadd.f32 %v2075, %v2180
        %v2232 = vadd.f32 %v2076, %v2183
        %v2233 = vadd.f32 %v2077, %v2185
        %v2234 = vadd.f32 %v2078, %v2188
        %v2235 = vadd.f32 %v2079, %v2190
        %v2236 = vadd.f32 %v2080, %v2193
        %v2237 = vadd.f32 %v2081, %v2195
        %v2238 = vadd.f32 %v2082, %v2198
        %v2239 = vadd.f32 %v2083, %v2200
        %v2240 = vadd.f32 %v2084, %v2203
        %v2241 = vadd.f32 %v2085, %v2205
        %v2242 = vadd.f32 %v2086, %v2208
        %v2243 = vadd.f32 %v2087, %v2210
        %v2245 = vrot.slane %v368, 5
        %v2246 = vrot.slane %v2245, 4
        %v2247 = vrot.slane %v369, 5
        %v2248 = vsel %vm1189, %v2246, %v2247
        %v2249 = vrot.slane %v2247, 4
        %v2250 = vrot.slane %v370, 5
        %v2251 = vsel %vm1189, %v2249, %v2250
        %s2252 = scalar_lea.vmem %s311, 32
        %v2253 = vld [vmem:[%s2252] sm:$0xf]
        %v2254 = vunpack.c.l.b16 %v2248
        %v2255 = vunpack.c.l.b16 %v2251
        %v2256 = vpack.c.b16 %v2255, %v2254
        %v2258 = vsel %vm809, %v2256, 0
        %v2261 = vsel %vm858, %v2253, 0
        %2263 = vmatpush.bf16.msra.mxu0 0
        %2264 = vmatpush.bf16.msra.mxu0 0
        %2265 = vmatpush.bf16.msra.mxu0 0
        %2266 = vmatpush.bf16.msra.mxu0 0
        %2267 = vmatpush.bf16.msra.mxu0 0
        %2268 = vmatpush.bf16.msra.mxu0 0
        %2269 = vmatpush.bf16.msra.mxu0 0
        %2270 = vmatpush.bf16.msra.mxu0 %v2261
        %2271 = vmatmul.bf16.gmra.mxu0 %v1359
        %v2272 = vpop.f32.mrf.mxu0
        %v2273 = vadd.f32 0.0, %v2272
        %v2274 = vpop.f32.mrf.mxu0
        %v2275 = vadd.f32 0.0, %v2274
        %2276 = vmatmul.bf16.gmra.mxu0 %v1362
        %v2277 = vpop.f32.mrf.mxu0
        %v2278 = vadd.f32 0.0, %v2277
        %v2279 = vpop.f32.mrf.mxu0
        %v2280 = vadd.f32 0.0, %v2279
        %2281 = vmatmul.bf16.gmra.mxu0 %v1365
        %v2282 = vpop.f32.mrf.mxu0
        %v2283 = vadd.f32 0.0, %v2282
        %v2284 = vpop.f32.mrf.mxu0
        %v2285 = vadd.f32 0.0, %v2284
        %2286 = vmatmul.bf16.gmra.mxu0 %v1368
        %v2287 = vpop.f32.mrf.mxu0
        %v2288 = vadd.f32 0.0, %v2287
        %v2289 = vpop.f32.mrf.mxu0
        %v2290 = vadd.f32 0.0, %v2289
        %2291 = vmatmul.bf16.gmra.mxu0 %v1371
        %v2292 = vpop.f32.mrf.mxu0
        %v2293 = vadd.f32 0.0, %v2292
        %v2294 = vpop.f32.mrf.mxu0
        %v2295 = vadd.f32 0.0, %v2294
        %2296 = vmatmul.bf16.gmra.mxu0 %v1374
        %v2297 = vpop.f32.mrf.mxu0
        %v2298 = vadd.f32 0.0, %v2297
        %v2299 = vpop.f32.mrf.mxu0
        %v2300 = vadd.f32 0.0, %v2299
        %2301 = vmatmul.bf16.gmra.mxu0 %v1377
        %v2302 = vpop.f32.mrf.mxu0
        %v2303 = vadd.f32 0.0, %v2302
        %v2304 = vpop.f32.mrf.mxu0
        %v2305 = vadd.f32 0.0, %v2304
        %2306 = vmatmul.bf16.gmra.mxu0 %v1380
        %v2307 = vpop.f32.mrf.mxu0
        %v2308 = vadd.f32 0.0, %v2307
        %v2309 = vpop.f32.mrf.mxu0
        %v2310 = vadd.f32 0.0, %v2309
        %2311 = vmatmul.bf16.gmra.mxu0 %v1383
        %v2312 = vpop.f32.mrf.mxu0
        %v2313 = vadd.f32 0.0, %v2312
        %v2314 = vpop.f32.mrf.mxu0
        %v2315 = vadd.f32 0.0, %v2314
        %2316 = vmatmul.bf16.gmra.mxu0 %v1386
        %v2317 = vpop.f32.mrf.mxu0
        %v2318 = vadd.f32 0.0, %v2317
        %v2319 = vpop.f32.mrf.mxu0
        %v2320 = vadd.f32 0.0, %v2319
        %2321 = vmatmul.bf16.gmra.mxu0 %v1389
        %v2322 = vpop.f32.mrf.mxu0
        %v2323 = vadd.f32 0.0, %v2322
        %v2324 = vpop.f32.mrf.mxu0
        %v2325 = vadd.f32 0.0, %v2324
        %2326 = vmatmul.bf16.gmra.mxu0 %v1392
        %v2327 = vpop.f32.mrf.mxu0
        %v2328 = vadd.f32 0.0, %v2327
        %v2329 = vpop.f32.mrf.mxu0
        %v2330 = vadd.f32 0.0, %v2329
        %2331 = vmatmul.bf16.gmra.mxu0 %v1395
        %v2332 = vpop.f32.mrf.mxu0
        %v2333 = vadd.f32 0.0, %v2332
        %v2334 = vpop.f32.mrf.mxu0
        %v2335 = vadd.f32 0.0, %v2334
        %2336 = vmatmul.bf16.gmra.mxu0 %v1398
        %v2337 = vpop.f32.mrf.mxu0
        %v2338 = vadd.f32 0.0, %v2337
        %v2339 = vpop.f32.mrf.mxu0
        %v2340 = vadd.f32 0.0, %v2339
        %2341 = vmatmul.bf16.gmra.mxu0 %v1828
        %v2342 = vpop.f32.mrf.mxu0
        %v2343 = vadd.f32 0.0, %v2342
        %v2344 = vpop.f32.mrf.mxu0
        %v2345 = vadd.f32 0.0, %v2344
        %2346 = vmatmul.bf16.gmra.mxu0 %v2258
        %v2347 = vpop.f32.mrf.mxu0
        %v2348 = vadd.f32 0.0, %v2347
        %v2349 = vpop.f32.mrf.mxu0
        %v2350 = vadd.f32 0.0, %v2349
        %2351 = vdwg.mxu0
        %v2352 = vadd.f32 %v2212, %v2273
        %v2353 = vadd.f32 %v2213, %v2275
        %v2354 = vadd.f32 %v2214, %v2278
        %v2355 = vadd.f32 %v2215, %v2280
        %v2356 = vadd.f32 %v2216, %v2283
        %v2357 = vadd.f32 %v2217, %v2285
        %v2358 = vadd.f32 %v2218, %v2288
        %v2359 = vadd.f32 %v2219, %v2290
        %v2360 = vadd.f32 %v2220, %v2293
        %v2361 = vadd.f32 %v2221, %v2295
        %v2362 = vadd.f32 %v2222, %v2298
        %v2363 = vadd.f32 %v2223, %v2300
        %v2364 = vadd.f32 %v2224, %v2303
        %v2365 = vadd.f32 %v2225, %v2305
        %v2366 = vadd.f32 %v2226, %v2308
        %v2367 = vadd.f32 %v2227, %v2310
        %v2368 = vadd.f32 %v2228, %v2313
        %v2369 = vadd.f32 %v2229, %v2315
        %v2370 = vadd.f32 %v2230, %v2318
        %v2371 = vadd.f32 %v2231, %v2320
        %v2372 = vadd.f32 %v2232, %v2323
        %v2373 = vadd.f32 %v2233, %v2325
        %v2374 = vadd.f32 %v2234, %v2328
        %v2375 = vadd.f32 %v2235, %v2330
        %v2376 = vadd.f32 %v2236, %v2333
        %v2377 = vadd.f32 %v2237, %v2335
        %v2378 = vadd.f32 %v2238, %v2338
        %v2379 = vadd.f32 %v2239, %v2340
        %v2380 = vadd.f32 %v2240, %v2343
        %v2381 = vadd.f32 %v2241, %v2345
        %v2382 = vadd.f32 %v2242, %v2348
        %v2383 = vadd.f32 %v2243, %v2350
        %v2384 = vld [vmem:[%s314] sm:$0x1]
        %v2386 = vperm.slane %v2384, 0
        %v2388 = vadd.f32 %v2352, %v2386
        %v2389 = vadd.f32 %v2353, %v2386
        %v2390 = vadd.f32 %v2354, %v2386
        %v2391 = vadd.f32 %v2355, %v2386
        %v2392 = vadd.f32 %v2356, %v2386
        %v2393 = vadd.f32 %v2357, %v2386
        %v2394 = vadd.f32 %v2358, %v2386
        %v2395 = vadd.f32 %v2359, %v2386
        %v2396 = vadd.f32 %v2360, %v2386
        %v2397 = vadd.f32 %v2361, %v2386
        %v2398 = vadd.f32 %v2362, %v2386
        %v2399 = vadd.f32 %v2363, %v2386
        %v2400 = vadd.f32 %v2364, %v2386
        %v2401 = vadd.f32 %v2365, %v2386
        %v2402 = vadd.f32 %v2366, %v2386
        %v2403 = vadd.f32 %v2367, %v2386
        %v2404 = vadd.f32 %v2368, %v2386
        %v2405 = vadd.f32 %v2369, %v2386
        %v2406 = vadd.f32 %v2370, %v2386
        %v2407 = vadd.f32 %v2371, %v2386
        %v2408 = vadd.f32 %v2372, %v2386
        %v2409 = vadd.f32 %v2373, %v2386
        %v2410 = vadd.f32 %v2374, %v2386
        %v2411 = vadd.f32 %v2375, %v2386
        %v2412 = vadd.f32 %v2376, %v2386
        %v2413 = vadd.f32 %v2377, %v2386
        %v2414 = vadd.f32 %v2378, %v2386
        %v2415 = vadd.f32 %v2379, %v2386
        %v2416 = vadd.f32 %v2380, %v2386
        %v2417 = vadd.f32 %v2381, %v2386
        %v2418 = vadd.f32 %v2382, %v2386
        %v2419 = vadd.f32 %v2383, %v2386
        %v2420 = vmax.f32 %v2388, 0.0
        %v2421 = vmax.f32 %v2389, 0.0
        %v2422 = vmax.f32 %v2390, 0.0
        %v2423 = vmax.f32 %v2391, 0.0
        %v2424 = vmax.f32 %v2392, 0.0
        %v2425 = vmax.f32 %v2393, 0.0
        %v2426 = vmax.f32 %v2394, 0.0
        %v2427 = vmax.f32 %v2395, 0.0
        %v2428 = vmax.f32 %v2396, 0.0
        %v2429 = vmax.f32 %v2397, 0.0
        %v2430 = vmax.f32 %v2398, 0.0
        %v2431 = vmax.f32 %v2399, 0.0
        %v2432 = vmax.f32 %v2400, 0.0
        %v2433 = vmax.f32 %v2401, 0.0
        %v2434 = vmax.f32 %v2402, 0.0
        %v2435 = vmax.f32 %v2403, 0.0
        %v2436 = vmax.f32 %v2404, 0.0
        %v2437 = vmax.f32 %v2405, 0.0
        %v2438 = vmax.f32 %v2406, 0.0
        %v2439 = vmax.f32 %v2407, 0.0
        %v2440 = vmax.f32 %v2408, 0.0
        %v2441 = vmax.f32 %v2409, 0.0
        %v2442 = vmax.f32 %v2410, 0.0
        %v2443 = vmax.f32 %v2411, 0.0
        %v2444 = vmax.f32 %v2412, 0.0
        %v2445 = vmax.f32 %v2413, 0.0
        %v2446 = vmax.f32 %v2414, 0.0
        %v2447 = vmax.f32 %v2415, 0.0
        %v2448 = vmax.f32 %v2416, 0.0
        %v2449 = vmax.f32 %v2417, 0.0
        %v2450 = vmax.f32 %v2418, 0.0
        %v2451 = vmax.f32 %v2419, 0.0
        %2452 = vst [vmem:[%s283] sm:$0xff] %v2420
        %2453 = vst [vmem:[%s283 + $0x8] sm:$0xff] %v2421
        %2454 = vst [vmem:[%s283 + $0x10] sm:$0xff] %v2422
        %2455 = vst [vmem:[%s283 + $0x18] sm:$0xff] %v2423
        %2456 = vst [vmem:[%s283 + $0x20] sm:$0xff] %v2424
        %2457 = vst [vmem:[%s283 + $0x28] sm:$0xff] %v2425
        %2458 = vst [vmem:[%s283 + $0x30] sm:$0xff] %v2426
        %2459 = vst [vmem:[%s283 + $0x38] sm:$0xff] %v2427
        %2460 = vst [vmem:[%s283 + $0x40] sm:$0xff] %v2428
        %2461 = vst [vmem:[%s283 + $0x48] sm:$0xff] %v2429
        %2462 = vst [vmem:[%s283 + $0x50] sm:$0xff] %v2430
        %2463 = vst [vmem:[%s283 + $0x58] sm:$0xff] %v2431
        %2464 = vst [vmem:[%s283 + $0x60] sm:$0xff] %v2432
        %2465 = vst [vmem:[%s283 + $0x68] sm:$0xff] %v2433
        %2466 = vst [vmem:[%s283 + $0x70] sm:$0xff] %v2434
        %2467 = vst [vmem:[%s283 + $0x78] sm:$0xff] %v2435
        %2468 = vst [vmem:[%s283 + $0x80] sm:$0xff] %v2436
        %2469 = vst [vmem:[%s283 + $0x88] sm:$0xff] %v2437
        %2470 = vst [vmem:[%s283 + $0x90] sm:$0xff] %v2438
        %2471 = vst [vmem:[%s283 + $0x98] sm:$0xff] %v2439
        %2472 = vst [vmem:[%s283 + $0xa0] sm:$0xff] %v2440
        %2473 = vst [vmem:[%s283 + $0xa8] sm:$0xff] %v2441
        %2474 = vst [vmem:[%s283 + $0xb0] sm:$0xff] %v2442
        %2475 = vst [vmem:[%s283 + $0xb8] sm:$0xff] %v2443
        %2476 = vst [vmem:[%s283 + $0xc0] sm:$0xff] %v2444
        %2477 = vst [vmem:[%s283 + $0xc8] sm:$0xff] %v2445
        %2478 = vst [vmem:[%s283 + $0xd0] sm:$0xff] %v2446
        %2479 = vst [vmem:[%s283 + $0xd8] sm:$0xff] %v2447
        %2480 = vst [vmem:[%s283 + $0xe0] sm:$0xff] %v2448
        %2481 = vst [vmem:[%s283 + $0xe8] sm:$0xff] %v2449
        %2482 = vst [vmem:[%s283 + $0xf0] sm:$0xff] %v2450
        %2483 = vst [vmem:[%s283 + $0xf8] sm:$0xff] %v2451
        %s2484 = sand.u32 %s159, 1
        %s2485 = scalar_lea.sflag [#allocation3], %s2484
        %s2486 = sand.u32 %s159, 1
        %s2487 = smul.addr %s2486, 256
        %s2488 = scalar_lea.vmem [#allocation2], %s2487
        // Predicated region
        $region37: #{tpu_custom_call.1} parent=35 // pred_check
          %p2489 = pneg %p169
        $region38: #{tpu_custom_call.1} parent=35 // pred_check_branch
          %2491 = sbr.rel (%p2489) target = $region40
        $region39: #{tpu_custom_call.1} parent=35 // pred_region
          %s2492 = smul.u32 32, %s25
          %2494 = vsyncadd %s2485, 0
          %s2495 = sadd.s32 %s23, %s2492
          %s2496 = smul.addr %s24, 32
          %s2497 = sadd.s32 %s2495, %s2496
          %s2498 = smul.addr %s2497, 8
          %s2499 = scalar_lea.hbm %s4, %s2498
          %s2500 = sshll.u32 %s2488, 4
          %s2501 = int_to_ptr.vmem [resolvable:$true] %s2500
          %s2502 = sshll.u32 %s2499, 4
          %s2503 = int_to_ptr.hbm [resolvable:$true] %s2502
          %2508 = dma.vmem_to_hbm [thread:$0]  %s2501, 4096, %s2503, %s2485, 128, 128, 8
        $region40: #{tpu_custom_call.1} parent=35 // pred_fallthru
          _
      $region36: #{tpu_custom_call.1} parent=5 // pred_fallthru
        _
      %p2509 = scmp.le.s32.totalorder 2, %s13
      // Predicated region
      $region41: #{tpu_custom_call.1} parent=5 // pred_check
        %p2510 = pneg %p2509
      $region42: #{tpu_custom_call.1} parent=5 // pred_check_branch
        %2512 = sbr.rel (%p2510) target = $region44
      $region43: #{tpu_custom_call.1} parent=5 // pred_region
        %s2513 = ssub.s32 %s13, 2
        // Predicated region
        $region45: #{tpu_custom_call.1} parent=43 // pred_check
          %p2514 = pneg %p175
        $region46: #{tpu_custom_call.1} parent=43 // pred_check_branch
          %2516 = sbr.rel (%p2514) target = $region48
        $region47: #{tpu_custom_call.1} parent=43 // pred_region
          %s2517 = sand.u32 %s160, 1
          %s2518 = scalar_lea.sflag [#allocation3], %s2517
          %s2519 = sand.u32 %s160, 1
          %s2520 = smul.addr %s2519, 256
          %s2521 = scalar_lea.vmem [#allocation2], %s2520
          %2523 = dma.done %s2518, 4096
        $region48: #{tpu_custom_call.1} parent=43 // pred_fallthru
          _
      $region44: #{tpu_custom_call.1} parent=5 // pred_fallthru
        _
    $region6: #{tpu_custom_call.1} parent=1 // loop_footer
      %s17 = sadd.s32 1, %s13
    $region7: #{tpu_custom_call.1} parent=1 // loop_footer_branch
      %12 = sbr.rel target = $region3
    $region8: #{tpu_custom_call.1} parent=1 // loop_exit
      _
    %2524 = vsyncpa [#allocation3], 1
    %s2525 = scalar_lea.sflag [#allocation3], 1
    %2526 = vsyncpa %s2525, 1

</llo_original>
